<compile_context>
chip_gen: v7x
topology: tpu7x:2x2x1
jax: 0.10.0
libtpu: 0.0.40
codegen_flags: <defaults>
</compile_context>

<pallas_src>
import functools

import jax
import jax.numpy as jnp
from jax import lax
from jax.experimental import pallas as pl
from jax.experimental.pallas import tpu as pltpu


def _round_up(a, m):
    return (a + m - 1) // m * m


def cnn_classifier2_kernel(xe_ref, xo_ref, w1_ref, b1_ref, w2c_ref, b2_ref,
                           wd1_ref, bd1_ref, wd2_ref, bd2_ref, out_ref,
                           *, Ppad, T2, NC):
    # xe_ref / xo_ref: (TB, Sp, E) bf16 — even / odd time positions of the input.
    TB, Sp, E = xe_ref.shape
    C1 = w1_ref.shape[2]          # 28
    C2 = b2_ref.shape[1]          # 128

    xe2 = xe_ref[...].reshape(TB * Sp, E)     # bf16, layout-trivial (Sp % 16 == 0)
    xo2 = xo_ref[...].reshape(TB * Sp, E)

    def tap(x2d, k):
        # One conv1 tap as a large-M MXU matmul: (TB*Sp, E) @ (E, 28), f32 acc.
        return jnp.dot(x2d, w1_ref[k],
                       preferred_element_type=jnp.float32).reshape(TB, Sp, C1)

    # ---- Conv1d(E -> 28, k=3) with MaxPool1d(2) folded in (even/odd streams) ----
    #   y1[2p]   = xe[p]@w0 + xo[p]@w1 + xe[p+1]@w2
    #   y1[2p+1] = xo[p]@w0 + xe[p+1]@w1 + xo[p+1]@w2
    # Each tap result is consumed immediately -> only acc_e, acc_o + 1 transient live.
    acc_e = tap(xe2, 0)[:, 0:Ppad]
    acc_e = acc_e + tap(xo2, 1)[:, 0:Ppad]
    acc_e = acc_e + tap(xe2, 2)[:, 1:Ppad + 1]
    acc_o = tap(xo2, 0)[:, 0:Ppad]
    acc_o = acc_o + tap(xe2, 1)[:, 1:Ppad + 1]
    acc_o = acc_o + tap(xo2, 2)[:, 1:Ppad + 1]

    # Pair-max (pool) + bias + ReLU, all in f32 on the VPU.
    h1 = jnp.maximum(jnp.maximum(acc_e, acc_o) + b1_ref[...], 0.0)  # (TB, Ppad, 28)

    # ---- Conv1d(28 -> 128, k=3): 3 taps fused into one (28, 384) matmul ----
    h1f = h1.astype(jnp.bfloat16).reshape(TB * Ppad, C1)            # Ppad % 16 == 0
    D = jnp.dot(h1f, w2c_ref[...],
                preferred_element_type=jnp.float32).reshape(TB, Ppad, 3 * C2)

    # MaxPool1d(2) -> ReLU -> global max-pool == ReLU(max over first T2 conv2 steps).
    # Tap k lives at lane offset k*128 (lane-tile aligned slices).
    y2 = (D[:, 0:T2, 0:C2]
          + D[:, 1:T2 + 1, C2:2 * C2]
          + D[:, 2:T2 + 2, 2 * C2:3 * C2]
          + b2_ref[...])                                            # (TB, T2, 128)
    g = jnp.maximum(jnp.max(y2, axis=1), 0.0)                       # (TB, 128)

    # ---- dense head: Linear(128,50) -> ReLU -> Linear(50,nc padded) -> Softmax ----
    z1 = jnp.dot(g.astype(jnp.bfloat16), wd1_ref[...],
                 preferred_element_type=jnp.float32) + bd1_ref[...]
    z1 = jnp.maximum(z1, 0.0)
    z2 = jnp.dot(z1.astype(jnp.bfloat16), wd2_ref[...],
                 preferred_element_type=jnp.float32) + bd2_ref[...]  # (TB, 128)

    # Mask padded class lanes so they contribute 0 to the softmax.
    col = lax.broadcasted_iota(jnp.int32, z2.shape, 1)
    z2 = jnp.where(col < NC, z2, -jnp.inf)
    m = jnp.max(z2, axis=-1, keepdims=True)
    e = jnp.exp(z2 - m)
    # approx reciprocal on the EUP; rows sum to 1 within ~1e-3 (not bit-parity).
    inv = pl.reciprocal(jnp.sum(e, axis=-1, keepdims=True), approx=True)
    out_ref[...] = e * inv                         # lane-dense (TB, 128) store


def _vmem_limit_bytes():
    cap = 128 * 1024 * 1024
    try:
        info = pltpu.get_tpu_info()
        c = getattr(info, "vmem_capacity_bytes", None)
        if c:
            cap = int(c)
    except Exception:
        pass
    # Keep headroom for Mosaic internal scratch; ~96 MiB on v5e/v6e, ~48 MiB on
    # v7x (64 MiB/TC).
    return min(cap * 3 // 4, 100 * 1024 * 1024)


def cnn_classifier2_forward(x, params, *, tb=256):
    """x: (bs, seq_len, embedding_dim) f32 -> (bs, num_classes) softmax probs."""
    w1, b1, w2, b2, wd1, bd1, wd2, bd2 = params
    bs, S, E = x.shape
    nc = wd2.shape[1]
    NCP = 128                     # lane-dense output width

    # Conv/pool geometry (nn.Conv1d k=3 / nn.MaxPool1d(2) floor semantics).
    if S % 2 == 1:                # last time step never survives pool1 when L1 is odd
        x = x[:, :S - 1]
        S -= 1
    Se = S // 2
    P1 = Se - 1                   # = (S-2)//2, pooled conv1 length
    L2 = P1 - 2                   # conv2 length
    T2 = 2 * (L2 // 2)            # conv2 positions that survive MaxPool1d(2)
    assert T2 >= 2, "seq_len too short for this architecture (need seq_len >= 10)"

    # Pad the halved time axis so the kernel can compute directly at Ppad
    # (multiple of 16 -> bf16/f32 reshapes are layout-trivial) with Sp >= Ppad+1.
    Ppad = _round_up(P1, 16)
    Sp = _round_up(Ppad + 1, 16)

    # De-interleave even/odd time positions; cast to bf16 in HBM (halves input DMA).
    xe = x[:, 0::2, :].astype(jnp.bfloat16)
    xo = x[:, 1::2, :].astype(jnp.bfloat16)
    if Sp != Se:
        tpad = ((0, 0), (0, Sp - Se), (0, 0))
        xe = jnp.pad(xe, tpad)
        xo = jnp.pad(xo, tpad)

    # ---- batch tile sizing from VMEM budget (generation aware) ----
    vmem_limit = _vmem_limit_bytes()
    # Rough per-example live set: bf16 inputs double-buffered + f32 conv1/conv2
    # intermediates (lane-padded to 128/384), with ~50% slack.
    per_ex = Sp * 128 * 72
    budget = int(vmem_limit * 0.8)
    tb_cap = max(8, (budget // per_ex) // 8 * 8)

    bs_pad = _round_up(bs, 8)
    TB = max(8, (min(tb, bs_pad, tb_cap) // 8) * 8)
    # Guarantee >= 2 grid steps when the batch allows (both v7x TensorCores busy).
    if bs_pad // TB < 2 and bs_pad >= 16:
        TB = max(8, ((bs_pad // 2) // 8) * 8)
    bs_pad = _round_up(bs_pad, TB)
    if bs_pad != bs:
        bpad = ((0, bs_pad - bs), (0, 0), (0, 0))
        xe = jnp.pad(xe, bpad)
        xo = jnp.pad(xo, bpad)

    # ---- weight prep (bf16 matmul operands, f32 biases) ----
    w1b = w1.astype(jnp.bfloat16)                                    # (3, E, 28)
    w2c = jnp.concatenate([w2[0], w2[1], w2[2]], axis=1).astype(jnp.bfloat16)  # (28, 384)
    wd1b = wd1.astype(jnp.bfloat16)                                  # (128, 50)
    wd2p = jnp.zeros((wd2.shape[0], NCP), wd2.dtype).at[:, :nc].set(wd2).astype(jnp.bfloat16)
    bd2p = jnp.zeros((1, NCP), bd2.dtype).at[:, :nc].set(bd2)

    kernel = functools.partial(cnn_classifier2_kernel, Ppad=Ppad, T2=T2, NC=nc)

    out = pl.pallas_call(
        kernel,
        out_shape=jax.ShapeDtypeStruct((bs_pad, NCP), jnp.float32),
        grid=(bs_pad // TB,),
        in_specs=[
            pl.BlockSpec((TB, Sp, E), lambda b: (b, 0, 0)),   # even-time input tile
            pl.BlockSpec((TB, Sp, E), lambda b: (b, 0, 0)),   # odd-time input tile
            pl.BlockSpec(w1b.shape, lambda b: (0, 0, 0)),     # weights: VMEM-resident
            pl.BlockSpec(b1.shape, lambda b: (0, 0)),
            pl.BlockSpec(w2c.shape, lambda b: (0, 0)),
            pl.BlockSpec(b2.shape, lambda b: (0, 0)),
            pl.BlockSpec(wd1b.shape, lambda b: (0, 0)),
            pl.BlockSpec(bd1.shape, lambda b: (0, 0)),
            pl.BlockSpec(wd2p.shape, lambda b: (0, 0)),
            pl.BlockSpec(bd2p.shape, lambda b: (0, 0)),
        ],
        out_specs=pl.BlockSpec((TB, NCP), lambda b: (b, 0)),
        compiler_params=pltpu.CompilerParams(
            dimension_semantics=("parallel",),
            vmem_limit_bytes=vmem_limit),
    )(xe, xo, w1b, b1, w2c, b2, wd1b, bd1, wd2p, bd2p)

    return out[:bs, :nc]


def init_params(key, embedding_dim=50, num_classes=4):
    """Synthetic parameters matching the module's shapes.

    PyTorch Conv1d weight (out_ch, in_ch, k) is stored here as (k, in_ch, out_ch);
    Linear weight (out, in) is stored here as (in, out).
    """
    ks = jax.random.split(key, 8)
    s = 0.1
    w1 = jax.random.normal(ks[0], (3, embedding_dim, 28), jnp.float32) * s
    b1 = jax.random.normal(ks[1], (1, 28), jnp.float32) * s
    w2 = jax.random.normal(ks[2], (3, 28, 128), jnp.float32) * s
    b2 = jax.random.normal(ks[3], (1, 128), jnp.float32) * s
    wd1 = jax.random.normal(ks[4], (128, 50), jnp.float32) * s
    bd1 = jax.random.normal(ks[5], (1, 50), jnp.float32) * s
    wd2 = jax.random.normal(ks[6], (50, num_classes), jnp.float32) * s
    bd2 = jax.random.normal(ks[7], (1, num_classes), jnp.float32) * s
    return (w1, b1, w2, b2, wd1, bd1, wd2, bd2)


def reference_forward(x, params):
    """Pure-JAX f32 reference with the exact PyTorch op order."""
    w1, b1, w2, b2, wd1, bd1, wd2, bd2 = params
    S = x.shape[1]
    L1 = S - 2
    y1 = sum(x[:, k:k + L1, :] @ w1[k] for k in range(3)) + b1
    P1 = L1 // 2
    h1 = jnp.maximum(jnp.maximum(y1[:, 0:2 * P1:2], y1[:, 1:2 * P1:2]), 0.0)
    L2 = P1 - 2
    y2 = sum(h1[:, k:k + L2, :] @ w2[k] for k in range(3)) + b2
    P2 = L2 // 2
    h2 = jnp.maximum(jnp.maximum(y2[:, 0:2 * P2:2], y2[:, 1:2 * P2:2]), 0.0)
    g = jnp.max(h2, axis=1)
    z1 = jnp.maximum(g @ wd1 + bd1, 0.0)
    z2 = z1 @ wd2 + bd2
    return jax.nn.softmax(z2, axis=-1)


if __name__ == "__main__":
    key = jax.random.PRNGKey(0)
    bs, seq_len, emb_dim, num_classes = 16, 18, 50, 4

    k_x, k_p = jax.random.split(key)
    x = jax.random.normal(k_x, (bs, seq_len, emb_dim), jnp.float32)
    params = init_params(k_p, embedding_dim=emb_dim, num_classes=num_classes)

    y = cnn_classifier2_forward(x, params)
    y = jax.block_until_ready(y)

    assert y.shape == (bs, num_classes)
    # softmax rows sum to ~1 (approx reciprocal -> small slack)
    assert bool(jnp.all(jnp.abs(jnp.sum(y, axis=1) - 1.0) < 5e-3))
    # match the f32 reference within bf16-matmul tolerance
    y_ref = reference_forward(x, params)
    assert bool(jnp.max(jnp.abs(y - y_ref)) < 6e-2)
    print("KERNEL_OK")
</pallas_src>

<mosaic_0001>
module attributes {stable_mosaic.version = 11 : i64} {
  func.func @cnn_classifier2_kernel(%arg0: i32, %arg1: memref<8x32x50xbf16, #tpu.memory_space<vmem>>, %arg2: memref<8x32x50xbf16, #tpu.memory_space<vmem>>, %arg3: memref<3x50x28xbf16, #tpu.memory_space<vmem>>, %arg4: memref<1x28xf32, #tpu.memory_space<vmem>>, %arg5: memref<28x384xbf16, #tpu.memory_space<vmem>>, %arg6: memref<1x128xf32, #tpu.memory_space<vmem>>, %arg7: memref<128x50xbf16, #tpu.memory_space<vmem>>, %arg8: memref<1x50xf32, #tpu.memory_space<vmem>>, %arg9: memref<50x128xbf16, #tpu.memory_space<vmem>>, %arg10: memref<1x128xf32, #tpu.memory_space<vmem>>, %arg11: memref<8x128xf32, #tpu.memory_space<vmem>>) attributes {dimension_semantics = [#tpu.dimension_semantics<parallel>], iteration_bounds = array<i64: 2>, scalar_prefetch = 0 : i64, scratch_operands = 0 : i64, tpu.core_type = #tpu.core_type<tc>, window_params = [{transform_indices = @transform_0, window_bounds = array<i64: 8, 32, 50>}, {transform_indices = @transform_1, window_bounds = array<i64: 8, 32, 50>}, {pipeline_mode = #tpu.pipeline_mode<synchronous>, transform_indices = @transform_2, window_bounds = array<i64: 3, 50, 28>}, {pipeline_mode = #tpu.pipeline_mode<synchronous>, transform_indices = @transform_3, window_bounds = array<i64: 1, 28>}, {pipeline_mode = #tpu.pipeline_mode<synchronous>, transform_indices = @transform_4, window_bounds = array<i64: 28, 384>}, {pipeline_mode = #tpu.pipeline_mode<synchronous>, transform_indices = @transform_5, window_bounds = array<i64: 1, 128>}, {pipeline_mode = #tpu.pipeline_mode<synchronous>, transform_indices = @transform_6, window_bounds = array<i64: 128, 50>}, {pipeline_mode = #tpu.pipeline_mode<synchronous>, transform_indices = @transform_7, window_bounds = array<i64: 1, 50>}, {pipeline_mode = #tpu.pipeline_mode<synchronous>, transform_indices = @transform_8, window_bounds = array<i64: 50, 128>}, {pipeline_mode = #tpu.pipeline_mode<synchronous>, transform_indices = @transform_9, window_bounds = array<i64: 1, 128>}, {transform_indices = @transform_10, window_bounds = array<i64: 8, 128>}]} {
    %c0 = arith.constant 0 : index
    %c0_0 = arith.constant 0 : index
    %c0_1 = arith.constant 0 : index
    %0 = vector.load %arg1[%c0, %c0_0, %c0_1] : memref<8x32x50xbf16, #tpu.memory_space<vmem>>, vector<8x32x50xbf16>
    %1 = vector.shape_cast %0 : vector<8x32x50xbf16> to vector<256x50xbf16>
    %c0_2 = arith.constant 0 : index
    %c0_3 = arith.constant 0 : index
    %c0_4 = arith.constant 0 : index
    %2 = vector.load %arg2[%c0_2, %c0_3, %c0_4] : memref<8x32x50xbf16, #tpu.memory_space<vmem>>, vector<8x32x50xbf16>
    %3 = vector.shape_cast %2 : vector<8x32x50xbf16> to vector<256x50xbf16>
    %c0_5 = arith.constant 0 : index
    %c0_6 = arith.constant 0 : index
    %c0_7 = arith.constant 0 : index
    %4 = vector.load %arg3[%c0_5, %c0_6, %c0_7] : memref<3x50x28xbf16, #tpu.memory_space<vmem>>, vector<1x50x28xbf16>
    %5 = vector.shape_cast %4 : vector<1x50x28xbf16> to vector<50x28xbf16>
    %cst = arith.constant dense<0.000000e+00> : vector<256x28xf32>
    %6 = tpu.matmul %1, %5, %cst {dimension_numbers = #tpu.dot_dimension_numbers<[1], [0], [0], [1], [0, 0, 1, 1], [], []>} : vector<256x50xbf16>, vector<50x28xbf16>, vector<256x28xf32> -> vector<256x28xf32>
    %7 = vector.shape_cast %6 : vector<256x28xf32> to vector<8x32x28xf32>
    %8 = vector.extract_strided_slice %7 {offsets = [0, 0, 0], sizes = [8, 16, 28], strides = [1, 1, 1]} : vector<8x32x28xf32> to vector<8x16x28xf32>
    %c1 = arith.constant 1 : index
    %c0_8 = arith.constant 0 : index
    %c0_9 = arith.constant 0 : index
    %9 = vector.load %arg3[%c1, %c0_8, %c0_9] : memref<3x50x28xbf16, #tpu.memory_space<vmem>>, vector<1x50x28xbf16>
    %10 = vector.shape_cast %9 : vector<1x50x28xbf16> to vector<50x28xbf16>
    %cst_10 = arith.constant dense<0.000000e+00> : vector<256x28xf32>
    %11 = tpu.matmul %3, %10, %cst_10 {dimension_numbers = #tpu.dot_dimension_numbers<[1], [0], [0], [1], [0, 0, 1, 1], [], []>} : vector<256x50xbf16>, vector<50x28xbf16>, vector<256x28xf32> -> vector<256x28xf32>
    %12 = vector.shape_cast %11 : vector<256x28xf32> to vector<8x32x28xf32>
    %13 = vector.extract_strided_slice %12 {offsets = [0, 0, 0], sizes = [8, 16, 28], strides = [1, 1, 1]} : vector<8x32x28xf32> to vector<8x16x28xf32>
    %14 = arith.addf %8, %13 : vector<8x16x28xf32>
    %c2 = arith.constant 2 : index
    %c0_11 = arith.constant 0 : index
    %c0_12 = arith.constant 0 : index
    %15 = vector.load %arg3[%c2, %c0_11, %c0_12] : memref<3x50x28xbf16, #tpu.memory_space<vmem>>, vector<1x50x28xbf16>
    %16 = vector.shape_cast %15 : vector<1x50x28xbf16> to vector<50x28xbf16>
    %cst_13 = arith.constant dense<0.000000e+00> : vector<256x28xf32>
    %17 = tpu.matmul %1, %16, %cst_13 {dimension_numbers = #tpu.dot_dimension_numbers<[1], [0], [0], [1], [0, 0, 1, 1], [], []>} : vector<256x50xbf16>, vector<50x28xbf16>, vector<256x28xf32> -> vector<256x28xf32>
    %18 = vector.shape_cast %17 : vector<256x28xf32> to vector<8x32x28xf32>
    %19 = vector.extract_strided_slice %18 {offsets = [0, 1, 0], sizes = [8, 16, 28], strides = [1, 1, 1]} : vector<8x32x28xf32> to vector<8x16x28xf32>
    %20 = arith.addf %14, %19 : vector<8x16x28xf32>
    %c0_14 = arith.constant 0 : index
    %c0_15 = arith.constant 0 : index
    %c0_16 = arith.constant 0 : index
    %21 = vector.load %arg3[%c0_14, %c0_15, %c0_16] : memref<3x50x28xbf16, #tpu.memory_space<vmem>>, vector<1x50x28xbf16>
    %22 = vector.shape_cast %21 : vector<1x50x28xbf16> to vector<50x28xbf16>
    %cst_17 = arith.constant dense<0.000000e+00> : vector<256x28xf32>
    %23 = tpu.matmul %3, %22, %cst_17 {dimension_numbers = #tpu.dot_dimension_numbers<[1], [0], [0], [1], [0, 0, 1, 1], [], []>} : vector<256x50xbf16>, vector<50x28xbf16>, vector<256x28xf32> -> vector<256x28xf32>
    %24 = vector.shape_cast %23 : vector<256x28xf32> to vector<8x32x28xf32>
    %25 = vector.extract_strided_slice %24 {offsets = [0, 0, 0], sizes = [8, 16, 28], strides = [1, 1, 1]} : vector<8x32x28xf32> to vector<8x16x28xf32>
    %c1_18 = arith.constant 1 : index
    %c0_19 = arith.constant 0 : index
    %c0_20 = arith.constant 0 : index
    %26 = vector.load %arg3[%c1_18, %c0_19, %c0_20] : memref<3x50x28xbf16, #tpu.memory_space<vmem>>, vector<1x50x28xbf16>
    %27 = vector.shape_cast %26 : vector<1x50x28xbf16> to vector<50x28xbf16>
    %cst_21 = arith.constant dense<0.000000e+00> : vector<256x28xf32>
    %28 = tpu.matmul %1, %27, %cst_21 {dimension_numbers = #tpu.dot_dimension_numbers<[1], [0], [0], [1], [0, 0, 1, 1], [], []>} : vector<256x50xbf16>, vector<50x28xbf16>, vector<256x28xf32> -> vector<256x28xf32>
    %29 = vector.shape_cast %28 : vector<256x28xf32> to vector<8x32x28xf32>
    %30 = vector.extract_strided_slice %29 {offsets = [0, 1, 0], sizes = [8, 16, 28], strides = [1, 1, 1]} : vector<8x32x28xf32> to vector<8x16x28xf32>
    %31 = arith.addf %25, %30 : vector<8x16x28xf32>
    %c2_22 = arith.constant 2 : index
    %c0_23 = arith.constant 0 : index
    %c0_24 = arith.constant 0 : index
    %32 = vector.load %arg3[%c2_22, %c0_23, %c0_24] : memref<3x50x28xbf16, #tpu.memory_space<vmem>>, vector<1x50x28xbf16>
    %33 = vector.shape_cast %32 : vector<1x50x28xbf16> to vector<50x28xbf16>
    %cst_25 = arith.constant dense<0.000000e+00> : vector<256x28xf32>
    %34 = tpu.matmul %3, %33, %cst_25 {dimension_numbers = #tpu.dot_dimension_numbers<[1], [0], [0], [1], [0, 0, 1, 1], [], []>} : vector<256x50xbf16>, vector<50x28xbf16>, vector<256x28xf32> -> vector<256x28xf32>
    %35 = vector.shape_cast %34 : vector<256x28xf32> to vector<8x32x28xf32>
    %36 = vector.extract_strided_slice %35 {offsets = [0, 1, 0], sizes = [8, 16, 28], strides = [1, 1, 1]} : vector<8x32x28xf32> to vector<8x16x28xf32>
    %37 = arith.addf %31, %36 : vector<8x16x28xf32>
    %38 = arith.maximumf %20, %37 : vector<8x16x28xf32>
    %c0_26 = arith.constant 0 : index
    %c0_27 = arith.constant 0 : index
    %39 = vector.load %arg4[%c0_26, %c0_27] : memref<1x28xf32, #tpu.memory_space<vmem>>, vector<1x28xf32>
    %40 = vector.shape_cast %39 : vector<1x28xf32> to vector<1x1x28xf32>
    %41 = vector.broadcast %40 : vector<1x1x28xf32> to vector<8x16x28xf32>
    %42 = arith.addf %38, %41 : vector<8x16x28xf32>
    %cst_28 = arith.constant 0.000000e+00 : f32
    %43 = vector.broadcast %cst_28 : f32 to vector<8x16x28xf32>
    %44 = arith.maximumf %42, %43 : vector<8x16x28xf32>
    %45 = arith.truncf %44 : vector<8x16x28xf32> to vector<8x16x28xbf16>
    %46 = vector.shape_cast %45 : vector<8x16x28xbf16> to vector<128x28xbf16>
    %c0_29 = arith.constant 0 : index
    %c0_30 = arith.constant 0 : index
    %47 = vector.load %arg5[%c0_29, %c0_30] : memref<28x384xbf16, #tpu.memory_space<vmem>>, vector<28x384xbf16>
    %cst_31 = arith.constant dense<0.000000e+00> : vector<128x384xf32>
    %48 = tpu.matmul %46, %47, %cst_31 {dimension_numbers = #tpu.dot_dimension_numbers<[1], [0], [0], [1], [0, 0, 1, 1], [], []>} : vector<128x28xbf16>, vector<28x384xbf16>, vector<128x384xf32> -> vector<128x384xf32>
    %49 = vector.shape_cast %48 : vector<128x384xf32> to vector<8x16x384xf32>
    %50 = vector.extract_strided_slice %49 {offsets = [0, 0, 0], sizes = [8, 6, 128], strides = [1, 1, 1]} : vector<8x16x384xf32> to vector<8x6x128xf32>
    %51 = vector.extract_strided_slice %49 {offsets = [0, 1, 128], sizes = [8, 6, 128], strides = [1, 1, 1]} : vector<8x16x384xf32> to vector<8x6x128xf32>
    %52 = arith.addf %50, %51 : vector<8x6x128xf32>
    %53 = vector.extract_strided_slice %49 {offsets = [0, 2, 256], sizes = [8, 6, 128], strides = [1, 1, 1]} : vector<8x16x384xf32> to vector<8x6x128xf32>
    %54 = arith.addf %52, %53 : vector<8x6x128xf32>
    %c0_32 = arith.constant 0 : index
    %c0_33 = arith.constant 0 : index
    %55 = vector.load %arg6[%c0_32, %c0_33] : memref<1x128xf32, #tpu.memory_space<vmem>>, vector<1x128xf32>
    %56 = vector.shape_cast %55 : vector<1x128xf32> to vector<1x1x128xf32>
    %57 = vector.broadcast %56 : vector<1x1x128xf32> to vector<8x6x128xf32>
    %58 = arith.addf %54, %57 : vector<8x6x128xf32>
    %cst_34 = arith.constant dense<0xFF800000> : vector<8x128xf32>
    %59 = vector.multi_reduction <maximumf>, %58, %cst_34 [1] : vector<8x6x128xf32> to vector<8x128xf32>
    %cst_35 = arith.constant 0.000000e+00 : f32
    %60 = vector.broadcast %cst_35 : f32 to vector<8x128xf32>
    %61 = arith.maximumf %59, %60 : vector<8x128xf32>
    %62 = arith.truncf %61 : vector<8x128xf32> to vector<8x128xbf16>
    %c0_36 = arith.constant 0 : index
    %c0_37 = arith.constant 0 : index
    %63 = vector.load %arg7[%c0_36, %c0_37] : memref<128x50xbf16, #tpu.memory_space<vmem>>, vector<128x50xbf16>
    %cst_38 = arith.constant dense<0.000000e+00> : vector<8x50xf32>
    %64 = tpu.matmul %62, %63, %cst_38 {dimension_numbers = #tpu.dot_dimension_numbers<[1], [0], [0], [1], [0, 0, 1, 1], [], []>} : vector<8x128xbf16>, vector<128x50xbf16>, vector<8x50xf32> -> vector<8x50xf32>
    %c0_39 = arith.constant 0 : index
    %c0_40 = arith.constant 0 : index
    %65 = vector.load %arg8[%c0_39, %c0_40] : memref<1x50xf32, #tpu.memory_space<vmem>>, vector<1x50xf32>
    %66 = vector.broadcast %65 : vector<1x50xf32> to vector<8x50xf32>
    %67 = arith.addf %64, %66 : vector<8x50xf32>
    %cst_41 = arith.constant 0.000000e+00 : f32
    %68 = vector.broadcast %cst_41 : f32 to vector<8x50xf32>
    %69 = arith.maximumf %67, %68 : vector<8x50xf32>
    %70 = arith.truncf %69 : vector<8x50xf32> to vector<8x50xbf16>
    %c0_42 = arith.constant 0 : index
    %c0_43 = arith.constant 0 : index
    %71 = vector.load %arg9[%c0_42, %c0_43] : memref<50x128xbf16, #tpu.memory_space<vmem>>, vector<50x128xbf16>
    %cst_44 = arith.constant dense<0.000000e+00> : vector<8x128xf32>
    %72 = tpu.matmul %70, %71, %cst_44 {dimension_numbers = #tpu.dot_dimension_numbers<[1], [0], [0], [1], [0, 0, 1, 1], [], []>} : vector<8x50xbf16>, vector<50x128xbf16>, vector<8x128xf32> -> vector<8x128xf32>
    %c0_45 = arith.constant 0 : index
    %c0_46 = arith.constant 0 : index
    %73 = vector.load %arg10[%c0_45, %c0_46] : memref<1x128xf32, #tpu.memory_space<vmem>>, vector<1x128xf32>
    %74 = vector.broadcast %73 : vector<1x128xf32> to vector<8x128xf32>
    %75 = arith.addf %72, %74 : vector<8x128xf32>
    %76 = tpu.iota {dimensions = array<i32: 1>} : vector<8x128xi32>
    %c4_i32 = arith.constant 4 : i32
    %77 = vector.broadcast %c4_i32 : i32 to vector<8x128xi32>
    %78 = arith.cmpi slt, %76, %77 : vector<8x128xi32>
    %cst_47 = arith.constant 0xFF800000 : f32
    %79 = vector.broadcast %cst_47 : f32 to vector<8x128xf32>
    %80 = arith.select %78, %75, %79 : vector<8x128xi1>, vector<8x128xf32>
    %cst_48 = arith.constant dense<0xFF800000> : vector<8xf32>
    %81 = vector.multi_reduction <maximumf>, %80, %cst_48 [1] : vector<8x128xf32> to vector<8xf32>
    %82 = vector.shape_cast %81 : vector<8xf32> to vector<8x1xf32>
    %83 = vector.broadcast %82 : vector<8x1xf32> to vector<8x128xf32>
    %84 = arith.subf %80, %83 : vector<8x128xf32>
    %85 = math.exp %84 : vector<8x128xf32>
    %cst_49 = arith.constant dense<0.000000e+00> : vector<8xf32>
    %86 = vector.multi_reduction <add>, %85, %cst_49 [1] : vector<8x128xf32> to vector<8xf32>
    %87 = vector.shape_cast %86 : vector<8xf32> to vector<8x1xf32>
    %88 = tpu.reciprocal %87 {approx = true} : vector<8x1xf32> -> vector<8x1xf32>
    %89 = vector.broadcast %88 : vector<8x1xf32> to vector<8x128xf32>
    %90 = arith.mulf %85, %89 : vector<8x128xf32>
    %c0_50 = arith.constant 0 : index
    %c0_51 = arith.constant 0 : index
    %91 = vector.load %arg11[%c0_50, %c0_51] : memref<8x128xf32, #tpu.memory_space<vmem>>, vector<8x128xf32>
    tpu.vector_store %arg11[%c0_50, %c0_51], %90 {strides = array<i32>} : memref<8x128xf32, #tpu.memory_space<vmem>>, vector<8x128xf32>,
    return
  }
  func.func @transform_0(%arg0: i32) -> (i32, i32, i32) {
    %c0_i32 = arith.constant 0 : i32
    %c0_i32_0 = arith.constant 0 : i32
    %c0_i32_1 = arith.constant 0 : i32
    return %arg0, %c0_i32, %c0_i32_0 : i32, i32, i32
  }
  func.func @transform_1(%arg0: i32) -> (i32, i32, i32) {
    %c0_i32 = arith.constant 0 : i32
    %c0_i32_0 = arith.constant 0 : i32
    %c0_i32_1 = arith.constant 0 : i32
    return %arg0, %c0_i32, %c0_i32_0 : i32, i32, i32
  }
  func.func @transform_2(%arg0: i32) -> (i32, i32, i32) {
    %c0_i32 = arith.constant 0 : i32
    %c0_i32_0 = arith.constant 0 : i32
    %c0_i32_1 = arith.constant 0 : i32
    %c0_i32_2 = arith.constant 0 : i32
    return %c0_i32, %c0_i32_0, %c0_i32_1 : i32, i32, i32
  }
  func.func @transform_3(%arg0: i32) -> (i32, i32) {
    %c0_i32 = arith.constant 0 : i32
    %c0_i32_0 = arith.constant 0 : i32
    %c0_i32_1 = arith.constant 0 : i32
    return %c0_i32, %c0_i32_0 : i32, i32
  }
  func.func @transform_4(%arg0: i32) -> (i32, i32) {
    %c0_i32 = arith.constant 0 : i32
    %c0_i32_0 = arith.constant 0 : i32
    %c0_i32_1 = arith.constant 0 : i32
    return %c0_i32, %c0_i32_0 : i32, i32
  }
  func.func @transform_5(%arg0: i32) -> (i32, i32) {
    %c0_i32 = arith.constant 0 : i32
    %c0_i32_0 = arith.constant 0 : i32
    %c0_i32_1 = arith.constant 0 : i32
    return %c0_i32, %c0_i32_0 : i32, i32
  }
  func.func @transform_6(%arg0: i32) -> (i32, i32) {
    %c0_i32 = arith.constant 0 : i32
    %c0_i32_0 = arith.constant 0 : i32
    %c0_i32_1 = arith.constant 0 : i32
    return %c0_i32, %c0_i32_0 : i32, i32
  }
  func.func @transform_7(%arg0: i32) -> (i32, i32) {
    %c0_i32 = arith.constant 0 : i32
    %c0_i32_0 = arith.constant 0 : i32
    %c0_i32_1 = arith.constant 0 : i32
    return %c0_i32, %c0_i32_0 : i32, i32
  }
  func.func @transform_8(%arg0: i32) -> (i32, i32) {
    %c0_i32 = arith.constant 0 : i32
    %c0_i32_0 = arith.constant 0 : i32
    %c0_i32_1 = arith.constant 0 : i32
    return %c0_i32, %c0_i32_0 : i32, i32
  }
  func.func @transform_9(%arg0: i32) -> (i32, i32) {
    %c0_i32 = arith.constant 0 : i32
    %c0_i32_0 = arith.constant 0 : i32
    %c0_i32_1 = arith.constant 0 : i32
    return %c0_i32, %c0_i32_0 : i32, i32
  }
  func.func @transform_10(%arg0: i32) -> (i32, i32) {
    %c0_i32 = arith.constant 0 : i32
    %c0_i32_0 = arith.constant 0 : i32
    return %arg0, %c0_i32 : i32, i32
  }
}

</mosaic_0001>

<llo_original>
// kernel: tpu_custom_call.1
$region0: #{tpu_custom_call.1}
  #allocation0 [shape = 'u32[]', space=smem, size = 0x4, offset = 0x4, fixed_abs, tag = 'smem constant byte address 0x4 - core index']
  #allocation1 [shape = 'u32[144,128]{1,0:T(1,128)}', space=vmem, size = 0x12000, scoped, tag = 'internal scratch']
  %s0 = inlined_call_operand.hbm [shape: bf16[16,32,50], index: 0, kind: input, shape index: {}]
  %s1 = inlined_call_operand.hbm [shape: bf16[16,32,50], index: 1, kind: input, shape index: {}]
  %s2 = inlined_call_operand.hbm [shape: bf16[3,50,28], index: 2, kind: input, shape index: {}]
  %s3 = inlined_call_operand.hbm [shape: f32[1,28], index: 3, kind: input, shape index: {}]
  %s4 = inlined_call_operand.hbm [shape: bf16[28,384], index: 4, kind: input, shape index: {}]
  %s5 = inlined_call_operand.hbm [shape: f32[1,128], index: 5, kind: input, shape index: {}]
  %s6 = inlined_call_operand.hbm [shape: bf16[128,50], index: 6, kind: input, shape index: {}]
  %s7 = inlined_call_operand.hbm [shape: f32[1,50], index: 7, kind: input, shape index: {}]
  %s8 = inlined_call_operand.hbm [shape: bf16[50,128], index: 8, kind: input, shape index: {}]
  %s9 = inlined_call_operand.hbm [shape: f32[1,128], index: 9, kind: input, shape index: {}]
  %s10 = inlined_call_operand.hbm [shape: f32[16,128], index: 10, kind: output, shape index: {}]
  %s11 = sld [smem:[#allocation0]]
  $region113: #{tpu_custom_call.1} parent=0
    _
  %s13 = ssub.s32 1, %s11
  %s14 = scalar_select 0, %s13, %s11
  $region1: #{tpu_custom_call.1} parent=0
    #allocation2 [shape = 'u8[131072]{0}', space=vmem, size = 0x20000, scoped, tag = 'input window, operand 0']
    #allocation3 [shape = 's32[2]{0}', space=sflag, size = 0x8, scoped, tag = 'scoped memory for tpu_custom_call.1']
    #allocation4 [shape = 's32[2]{0}', space=sflag, size = 0x8, scoped, tag = 'scoped memory for tpu_custom_call.1']
    #allocation5 [shape = 'u8[131072]{0}', space=vmem, size = 0x20000, scoped, tag = 'input window, operand 1']
    #allocation6 [shape = 's32[2]{0}', space=sflag, size = 0x8, scoped, tag = 'scoped memory for tpu_custom_call.1']
    #allocation7 [shape = 'u8[43008]{0}', space=vmem, size = 0xa800, scoped, tag = 'input window, operand 2, single buffered']
    #allocation8 [shape = 'u8[512]{0}', space=vmem, size = 0x400, scoped, tag = 'input window, operand 3, single buffered']
    #allocation9 [shape = 's32[1]{0}', space=sflag, size = 0x4, scoped, tag = 'scoped memory for tpu_custom_call.1']
    #allocation10 [shape = 'u8[24576]{0}', space=vmem, size = 0x6000, scoped, tag = 'input window, operand 4, single buffered']
    #allocation11 [shape = 'u8[512]{0}', space=vmem, size = 0x400, scoped, tag = 'input window, operand 5, single buffered']
    #allocation12 [shape = 's32[1]{0}', space=sflag, size = 0x4, scoped, tag = 'scoped memory for tpu_custom_call.1']
    #allocation13 [shape = 'u8[32768]{0}', space=vmem, size = 0x8000, scoped, tag = 'input window, operand 6, single buffered']
    #allocation14 [shape = 'u8[512]{0}', space=vmem, size = 0x400, scoped, tag = 'input window, operand 7, single buffered']
    #allocation15 [shape = 's32[1]{0}', space=sflag, size = 0x4, scoped, tag = 'scoped memory for tpu_custom_call.1']
    #allocation16 [shape = 'u8[14336]{0}', space=vmem, size = 0x3800, scoped, tag = 'input window, operand 8, single buffered']
    #allocation17 [shape = 'u8[512]{0}', space=vmem, size = 0x400, scoped, tag = 'input window, operand 9, single buffered']
    #allocation18 [shape = 's32[1]{0}', space=sflag, size = 0x4, scoped, tag = 'scoped memory for tpu_custom_call.1']
    #allocation19 [shape = 'u8[8192]{0}', space=vmem, size = 0x2000, scoped, tag = 'output window, operand 0']
    %15 = vsyncpa [#allocation3], 0
    %s16 = scalar_lea.sflag [#allocation3], 1
    %17 = vsyncpa %s16, 0
    %18 = vsyncpa [#allocation6], 0
    %s19 = scalar_lea.sflag [#allocation6], 1
    %20 = vsyncpa %s19, 0
    %21 = vsyncpa [#allocation9], 0
    %22 = vsyncpa [#allocation12], 0
    %23 = vsyncpa [#allocation15], 0
    %24 = vsyncpa [#allocation18], 0
    %25 = vsyncpa [#allocation4], 0
    %s26 = scalar_lea.sflag [#allocation4], 1
    %27 = vsyncpa %s26, 0
    loop: start=0, step=1, limit=4
    $region2: #{tpu_custom_call.1} parent=1 // loop_pre_header
      _
    $region3: #{tpu_custom_call.1} parent=1 // loop_header
      %s29 = sphi 0, %s33
      %p30 = scmp.ge.s32.totalorder %s29, 4
      %s39 = sphi 0, %s41
      %s42 = sphi 0, %s39
      %s43 = sphi 0, %s42
      %s59 = sphi 0, %s43
      %s65 = sphi 0, %s67
      %s68 = sphi 0, %s65
      %s69 = sphi 0, %s68
      %s85 = sphi 0, %s69
      %s89 = sphi 0, %s89
      %s91 = sphi 0, %s89
      %s92 = sphi 0, %s91
      %s106 = sphi 0, %s92
      %s110 = sphi 0, %s110
      %s112 = sphi 0, %s110
      %s113 = sphi 0, %s112
      %s127 = sphi 0, %s113
      %s131 = sphi 0, %s131
      %s133 = sphi 0, %s131
      %s134 = sphi 0, %s133
      %s148 = sphi 0, %s134
      %s152 = sphi 0, %s152
      %s154 = sphi 0, %s152
      %s155 = sphi 0, %s154
      %s169 = sphi 0, %s155
      %s173 = sphi 0, %s173
      %s175 = sphi 0, %s173
      %s176 = sphi 0, %s175
      %s190 = sphi 0, %s176
      %s194 = sphi 0, %s194
      %s196 = sphi 0, %s194
      %s197 = sphi 0, %s196
      %s211 = sphi 0, %s197
      %s215 = sphi 0, %s215
      %s217 = sphi 0, %s215
      %s218 = sphi 0, %s217
      %s232 = sphi 0, %s218
      %s236 = sphi 0, %s236
      %s238 = sphi 0, %s236
      %s239 = sphi 0, %s238
      %s253 = sphi 0, %s239
      %s259 = sphi 0, %s261
      %s262 = sphi 0, %s259
      %s263 = sphi 0, %s262
      %s279 = sphi 0, %s263
    $region4: #{tpu_custom_call.1} parent=1 // loop_header_branch
      %32 = sbr.rel (%p30) target = $region8
    $region5: #{tpu_custom_call.1} parent=1 // loop_body
      %s34 = ssub.s32 %s29, 1
      %s35 = ssub.s32 %s29, 2
      %s36 = sadd.s32 %s29, 1
      %s37 = ssub.s32 %s29, %s36
      %p38 = scmp.eq.s32.totalorder %s37, 0
      %s40 = sadd.s32 %s39, 1
      %s41 = scalar_select %p38, %s39, %s40
      %p44 = pneg %p38
      %p45 = scmp.eq.s32.totalorder %s29, 1
      %p46 = por %p44, %p45
      %p47 = scmp.ne.s32.totalorder %s39, %s42
      %p48 = scmp.eq.s32.totalorder %s29, 0
      %p49 = por %p47, %p48
      %p50 = scmp.ne.s32.totalorder %s39, %s42
      %p51 = scmp.eq.s32.totalorder %s34, 1
      %p52 = por %p50, %p51
      %p53 = scmp.ne.s32.totalorder %s42, %s43
      %p54 = scmp.eq.s32.totalorder %s34, 0
      %p55 = por %p53, %p54
      %p56 = scmp.ne.s32.totalorder %s42, %s43
      %p57 = scmp.eq.s32.totalorder %s35, 1
      %p58 = por %p56, %p57
      %p60 = scmp.ne.s32.totalorder %s43, %s59
      %p61 = scmp.eq.s32.totalorder %s35, 0
      %p62 = por %p60, %p61
      %s63 = ssub.s32 %s29, %s36
      %p64 = scmp.eq.s32.totalorder %s63, 0
      %s66 = sadd.s32 %s65, 1
      %s67 = scalar_select %p64, %s65, %s66
      %p70 = pneg %p64
      %p71 = scmp.eq.s32.totalorder %s29, 1
      %p72 = por %p70, %p71
      %p73 = scmp.ne.s32.totalorder %s65, %s68
      %p74 = scmp.eq.s32.totalorder %s29, 0
      %p75 = por %p73, %p74
      %p76 = scmp.ne.s32.totalorder %s65, %s68
      %p77 = scmp.eq.s32.totalorder %s34, 1
      %p78 = por %p76, %p77
      %p79 = scmp.ne.s32.totalorder %s68, %s69
      %p80 = scmp.eq.s32.totalorder %s34, 0
      %p81 = por %p79, %p80
      %p82 = scmp.ne.s32.totalorder %s68, %s69
      %p83 = scmp.eq.s32.totalorder %s35, 1
      %p84 = por %p82, %p83
      %p86 = scmp.ne.s32.totalorder %s69, %s85
      %p87 = scmp.eq.s32.totalorder %s35, 0
      %p88 = por %p86, %p87
      %s90 = sadd.s32 %s89, 1
      %p93 = scmp.eq.s32.totalorder %s29, 1
      %p94 = scmp.ne.s32.totalorder %s89, %s91
      %p95 = scmp.eq.s32.totalorder %s29, 0
      %p96 = por %p94, %p95
      %p97 = scmp.ne.s32.totalorder %s89, %s91
      %p98 = scmp.eq.s32.totalorder %s34, 1
      %p99 = por %p97, %p98
      %p100 = scmp.ne.s32.totalorder %s91, %s92
      %p101 = scmp.eq.s32.totalorder %s34, 0
      %p102 = por %p100, %p101
      %p103 = scmp.ne.s32.totalorder %s91, %s92
      %p104 = scmp.eq.s32.totalorder %s35, 1
      %p105 = por %p103, %p104
      %p107 = scmp.ne.s32.totalorder %s92, %s106
      %p108 = scmp.eq.s32.totalorder %s35, 0
      %p109 = por %p107, %p108
      %s111 = sadd.s32 %s110, 1
      %p114 = scmp.eq.s32.totalorder %s29, 1
      %p115 = scmp.ne.s32.totalorder %s110, %s112
      %p116 = scmp.eq.s32.totalorder %s29, 0
      %p117 = por %p115, %p116
      %p118 = scmp.ne.s32.totalorder %s110, %s112
      %p119 = scmp.eq.s32.totalorder %s34, 1
      %p120 = por %p118, %p119
      %p121 = scmp.ne.s32.totalorder %s112, %s113
      %p122 = scmp.eq.s32.totalorder %s34, 0
      %p123 = por %p121, %p122
      %p124 = scmp.ne.s32.totalorder %s112, %s113
      %p125 = scmp.eq.s32.totalorder %s35, 1
      %p126 = por %p124, %p125
      %p128 = scmp.ne.s32.totalorder %s113, %s127
      %p129 = scmp.eq.s32.totalorder %s35, 0
      %p130 = por %p128, %p129
      %s132 = sadd.s32 %s131, 1
      %p135 = scmp.eq.s32.totalorder %s29, 1
      %p136 = scmp.ne.s32.totalorder %s131, %s133
      %p137 = scmp.eq.s32.totalorder %s29, 0
      %p138 = por %p136, %p137
      %p139 = scmp.ne.s32.totalorder %s131, %s133
      %p140 = scmp.eq.s32.totalorder %s34, 1
      %p141 = por %p139, %p140
      %p142 = scmp.ne.s32.totalorder %s133, %s134
      %p143 = scmp.eq.s32.totalorder %s34, 0
      %p144 = por %p142, %p143
      %p145 = scmp.ne.s32.totalorder %s133, %s134
      %p146 = scmp.eq.s32.totalorder %s35, 1
      %p147 = por %p145, %p146
      %p149 = scmp.ne.s32.totalorder %s134, %s148
      %p150 = scmp.eq.s32.totalorder %s35, 0
      %p151 = por %p149, %p150
      %s153 = sadd.s32 %s152, 1
      %p156 = scmp.eq.s32.totalorder %s29, 1
      %p157 = scmp.ne.s32.totalorder %s152, %s154
      %p158 = scmp.eq.s32.totalorder %s29, 0
      %p159 = por %p157, %p158
      %p160 = scmp.ne.s32.totalorder %s152, %s154
      %p161 = scmp.eq.s32.totalorder %s34, 1
      %p162 = por %p160, %p161
      %p163 = scmp.ne.s32.totalorder %s154, %s155
      %p164 = scmp.eq.s32.totalorder %s34, 0
      %p165 = por %p163, %p164
      %p166 = scmp.ne.s32.totalorder %s154, %s155
      %p167 = scmp.eq.s32.totalorder %s35, 1
      %p168 = por %p166, %p167
      %p170 = scmp.ne.s32.totalorder %s155, %s169
      %p171 = scmp.eq.s32.totalorder %s35, 0
      %p172 = por %p170, %p171
      %s174 = sadd.s32 %s173, 1
      %p177 = scmp.eq.s32.totalorder %s29, 1
      %p178 = scmp.ne.s32.totalorder %s173, %s175
      %p179 = scmp.eq.s32.totalorder %s29, 0
      %p180 = por %p178, %p179
      %p181 = scmp.ne.s32.totalorder %s173, %s175
      %p182 = scmp.eq.s32.totalorder %s34, 1
      %p183 = por %p181, %p182
      %p184 = scmp.ne.s32.totalorder %s175, %s176
      %p185 = scmp.eq.s32.totalorder %s34, 0
      %p186 = por %p184, %p185
      %p187 = scmp.ne.s32.totalorder %s175, %s176
      %p188 = scmp.eq.s32.totalorder %s35, 1
      %p189 = por %p187, %p188
      %p191 = scmp.ne.s32.totalorder %s176, %s190
      %p192 = scmp.eq.s32.totalorder %s35, 0
      %p193 = por %p191, %p192
      %s195 = sadd.s32 %s194, 1
      %p198 = scmp.eq.s32.totalorder %s29, 1
      %p199 = scmp.ne.s32.totalorder %s194, %s196
      %p200 = scmp.eq.s32.totalorder %s29, 0
      %p201 = por %p199, %p200
      %p202 = scmp.ne.s32.totalorder %s194, %s196
      %p203 = scmp.eq.s32.totalorder %s34, 1
      %p204 = por %p202, %p203
      %p205 = scmp.ne.s32.totalorder %s196, %s197
      %p206 = scmp.eq.s32.totalorder %s34, 0
      %p207 = por %p205, %p206
      %p208 = scmp.ne.s32.totalorder %s196, %s197
      %p209 = scmp.eq.s32.totalorder %s35, 1
      %p210 = por %p208, %p209
      %p212 = scmp.ne.s32.totalorder %s197, %s211
      %p213 = scmp.eq.s32.totalorder %s35, 0
      %p214 = por %p212, %p213
      %s216 = sadd.s32 %s215, 1
      %p219 = scmp.eq.s32.totalorder %s29, 1
      %p220 = scmp.ne.s32.totalorder %s215, %s217
      %p221 = scmp.eq.s32.totalorder %s29, 0
      %p222 = por %p220, %p221
      %p223 = scmp.ne.s32.totalorder %s215, %s217
      %p224 = scmp.eq.s32.totalorder %s34, 1
      %p225 = por %p223, %p224
      %p226 = scmp.ne.s32.totalorder %s217, %s218
      %p227 = scmp.eq.s32.totalorder %s34, 0
      %p228 = por %p226, %p227
      %p229 = scmp.ne.s32.totalorder %s217, %s218
      %p230 = scmp.eq.s32.totalorder %s35, 1
      %p231 = por %p229, %p230
      %p233 = scmp.ne.s32.totalorder %s218, %s232
      %p234 = scmp.eq.s32.totalorder %s35, 0
      %p235 = por %p233, %p234
      %s237 = sadd.s32 %s236, 1
      %p240 = scmp.eq.s32.totalorder %s29, 1
      %p241 = scmp.ne.s32.totalorder %s236, %s238
      %p242 = scmp.eq.s32.totalorder %s29, 0
      %p243 = por %p241, %p242
      %p244 = scmp.ne.s32.totalorder %s236, %s238
      %p245 = scmp.eq.s32.totalorder %s34, 1
      %p246 = por %p244, %p245
      %p247 = scmp.ne.s32.totalorder %s238, %s239
      %p248 = scmp.eq.s32.totalorder %s34, 0
      %p249 = por %p247, %p248
      %p250 = scmp.ne.s32.totalorder %s238, %s239
      %p251 = scmp.eq.s32.totalorder %s35, 1
      %p252 = por %p250, %p251
      %p254 = scmp.ne.s32.totalorder %s239, %s253
      %p255 = scmp.eq.s32.totalorder %s35, 0
      %p256 = por %p254, %p255
      %s257 = ssub.s32 %s29, %s36
      %p258 = scmp.eq.s32.totalorder %s257, 0
      %s260 = sadd.s32 %s259, 1
      %s261 = scalar_select %p258, %s259, %s260
      %p264 = pneg %p258
      %p265 = scmp.eq.s32.totalorder %s29, 1
      %p266 = por %p264, %p265
      %p267 = scmp.ne.s32.totalorder %s259, %s262
      %p268 = scmp.eq.s32.totalorder %s29, 0
      %p269 = por %p267, %p268
      %p270 = scmp.ne.s32.totalorder %s259, %s262
      %p271 = scmp.eq.s32.totalorder %s34, 1
      %p272 = por %p270, %p271
      %p273 = scmp.ne.s32.totalorder %s262, %s263
      %p274 = scmp.eq.s32.totalorder %s34, 0
      %p275 = por %p273, %p274
      %p276 = scmp.ne.s32.totalorder %s262, %s263
      %p277 = scmp.eq.s32.totalorder %s35, 1
      %p278 = por %p276, %p277
      %p280 = scmp.ne.s32.totalorder %s263, %s279
      %p281 = scmp.eq.s32.totalorder %s35, 0
      %p282 = por %p280, %p281
      %p283 = scmp.le.s32.totalorder 1, %s29
      %p284 = scmp.lt.s32.totalorder %s29, 3
      %p285 = pnand %p283, %p284
      %p286 = pneg %p285
      // Predicated region
      $region9: #{tpu_custom_call.1} parent=5 // pred_check
        _
      $region10: #{tpu_custom_call.1} parent=5 // pred_check_branch
        %288 = sbr.rel (%p285) target = $region12
      $region11: #{tpu_custom_call.1} parent=5 // pred_region
        %s289 = ssub.s32 %s29, 1
        // Predicated region
        $region13: #{tpu_custom_call.1} parent=11 // pred_check
          %p290 = pneg %p102
        $region14: #{tpu_custom_call.1} parent=11 // pred_check_branch
          %292 = sbr.rel (%p290) target = $region16
        $region15: #{tpu_custom_call.1} parent=11 // pred_region
          %s294 = ssub.s32 1344, 1344
          %295 = vsyncadd [#allocation6], %s294
          %s296 = sshll.u32 [#allocation7], 4
          %s297 = int_to_ptr.vmem [resolvable:$true] %s296
          %302 = dma.hbm_to_vmem [thread:$0]  %s2, 1344, %s297, [#allocation6], 64, 64, 4
        $region16: #{tpu_custom_call.1} parent=11 // pred_fallthru
          _
        // Predicated region
        $region17: #{tpu_custom_call.1} parent=11 // pred_check
          %p303 = pneg %p123
        $region18: #{tpu_custom_call.1} parent=11 // pred_check_branch
          %305 = sbr.rel (%p303) target = $region20
        $region19: #{tpu_custom_call.1} parent=11 // pred_region
          %s307 = ssub.s32 16, 16
          %308 = vsyncadd [#allocation9], %s307
          %s310 = sshll.u32 [#allocation8], 4
          %s311 = int_to_ptr.vmem [resolvable:$true] %s310
          %313 = dma.hbm_to_vmem [thread:$0]  %s3, 16, %s311, [#allocation9]
        $region20: #{tpu_custom_call.1} parent=11 // pred_fallthru
          _
        // Predicated region
        $region21: #{tpu_custom_call.1} parent=11 // pred_check
          %p314 = pneg %p144
        $region22: #{tpu_custom_call.1} parent=11 // pred_check_branch
          %316 = sbr.rel (%p314) target = $region24
        $region23: #{tpu_custom_call.1} parent=11 // pred_region
          %s318 = ssub.s32 768, 768
          %319 = vsyncadd [#allocation9], %s318
          %s320 = sshll.u32 [#allocation10], 4
          %s321 = int_to_ptr.vmem [resolvable:$true] %s320
          %326 = dma.hbm_to_vmem [thread:$0]  %s4, 768, %s321, [#allocation9], 192, 192, 12
        $region24: #{tpu_custom_call.1} parent=11 // pred_fallthru
          _
        // Predicated region
        $region25: #{tpu_custom_call.1} parent=11 // pred_check
          %p327 = pneg %p165
        $region26: #{tpu_custom_call.1} parent=11 // pred_check_branch
          %329 = sbr.rel (%p327) target = $region28
        $region27: #{tpu_custom_call.1} parent=11 // pred_region
          %s331 = ssub.s32 16, 16
          %332 = vsyncadd [#allocation12], %s331
          %s334 = sshll.u32 [#allocation11], 4
          %s335 = int_to_ptr.vmem [resolvable:$true] %s334
          %337 = dma.hbm_to_vmem [thread:$0]  %s5, 16, %s335, [#allocation12]
        $region28: #{tpu_custom_call.1} parent=11 // pred_fallthru
          _
        // Predicated region
        $region29: #{tpu_custom_call.1} parent=11 // pred_check
          %p338 = pneg %p186
        $region30: #{tpu_custom_call.1} parent=11 // pred_check_branch
          %340 = sbr.rel (%p338) target = $region32
        $region31: #{tpu_custom_call.1} parent=11 // pred_region
          %s342 = ssub.s32 1024, 1024
          %343 = vsyncadd [#allocation12], %s342
          %s344 = sshll.u32 [#allocation13], 4
          %s345 = int_to_ptr.vmem [resolvable:$true] %s344
          %350 = dma.hbm_to_vmem [thread:$0]  %s6, 1024, %s345, [#allocation12], 64, 64, 4
        $region32: #{tpu_custom_call.1} parent=11 // pred_fallthru
          _
        // Predicated region
        $region33: #{tpu_custom_call.1} parent=11 // pred_check
          %p351 = pneg %p207
        $region34: #{tpu_custom_call.1} parent=11 // pred_check_branch
          %353 = sbr.rel (%p351) target = $region36
        $region35: #{tpu_custom_call.1} parent=11 // pred_region
          %s355 = ssub.s32 16, 16
          %356 = vsyncadd [#allocation15], %s355
          %s358 = sshll.u32 [#allocation14], 4
          %s359 = int_to_ptr.vmem [resolvable:$true] %s358
          %361 = dma.hbm_to_vmem [thread:$0]  %s7, 16, %s359, [#allocation15]
        $region36: #{tpu_custom_call.1} parent=11 // pred_fallthru
          _
        // Predicated region
        $region37: #{tpu_custom_call.1} parent=11 // pred_check
          %p362 = pneg %p228
        $region38: #{tpu_custom_call.1} parent=11 // pred_check_branch
          %364 = sbr.rel (%p362) target = $region40
        $region39: #{tpu_custom_call.1} parent=11 // pred_region
          %s366 = ssub.s32 448, 448
          %367 = vsyncadd [#allocation15], %s366
          %s368 = sshll.u32 [#allocation16], 4
          %s369 = int_to_ptr.vmem [resolvable:$true] %s368
          %374 = dma.hbm_to_vmem [thread:$0]  %s8, 448, %s369, [#allocation15], 64, 64, 4
        $region40: #{tpu_custom_call.1} parent=11 // pred_fallthru
          _
        // Predicated region
        $region41: #{tpu_custom_call.1} parent=11 // pred_check
          %p375 = pneg %p249
        $region42: #{tpu_custom_call.1} parent=11 // pred_check_branch
          %377 = sbr.rel (%p375) target = $region44
        $region43: #{tpu_custom_call.1} parent=11 // pred_region
          %s379 = ssub.s32 16, 16
          %380 = vsyncadd [#allocation18], %s379
          %s382 = sshll.u32 [#allocation17], 4
          %s383 = int_to_ptr.vmem [resolvable:$true] %s382
          %385 = dma.hbm_to_vmem [thread:$0]  %s9, 16, %s383, [#allocation18]
        $region44: #{tpu_custom_call.1} parent=11 // pred_fallthru
          _
      $region12: #{tpu_custom_call.1} parent=5 // pred_fallthru
        _
      %p386 = scmp.lt.s32.totalorder %s29, 2
      // Predicated region
      $region45: #{tpu_custom_call.1} parent=5 // pred_check
        %p387 = pneg %p386
      $region46: #{tpu_custom_call.1} parent=5 // pred_check_branch
        %389 = sbr.rel (%p387) target = $region48
      $region47: #{tpu_custom_call.1} parent=5 // pred_region
        // Predicated region
        $region49: #{tpu_custom_call.1} parent=47 // pred_check
          %p390 = pneg %p49
        $region50: #{tpu_custom_call.1} parent=47 // pred_check_branch
          %392 = sbr.rel (%p390) target = $region52
        $region51: #{tpu_custom_call.1} parent=47 // pred_region
          %s393 = sand.u32 %s39, 1
          %s394 = scalar_lea.sflag [#allocation3], %s393
          %s395 = sand.u32 %s39, 1
          %s396 = smul.addr %s395, 128
          %s397 = scalar_lea.vmem [#allocation2], %s396
          %s398 = smul.u32 8, %s29
          %s400 = ssub.s32 2048, 2048
          %401 = vsyncadd %s394, %s400
          %s402 = smul.addr %s398, 4
          %s403 = smul.addr %s402, 64
          %s404 = scalar_lea.hbm %s0, %s403
          %s405 = sshll.u32 %s397, 4
          %s406 = int_to_ptr.vmem [resolvable:$true] %s405
          %411 = dma.hbm_to_vmem [thread:$0]  %s404, 2048, %s406, %s394, 64, 64, 4
        $region52: #{tpu_custom_call.1} parent=47 // pred_fallthru
          _
        // Predicated region
        $region53: #{tpu_custom_call.1} parent=47 // pred_check
          %p412 = pneg %p75
        $region54: #{tpu_custom_call.1} parent=47 // pred_check_branch
          %414 = sbr.rel (%p412) target = $region56
        $region55: #{tpu_custom_call.1} parent=47 // pred_region
          %s415 = sand.u32 %s29, 1
          %s416 = scalar_lea.sflag [#allocation6], %s415
          %s417 = sand.u32 %s65, 1
          %s418 = smul.addr %s417, 128
          %s419 = scalar_lea.vmem [#allocation5], %s418
          %s420 = smul.u32 8, %s29
          %s422 = ssub.s32 2048, 2048
          %423 = vsyncadd %s416, %s422
          %s424 = smul.addr %s420, 4
          %s425 = smul.addr %s424, 64
          %s426 = scalar_lea.hbm %s1, %s425
          %s427 = sshll.u32 %s419, 4
          %s428 = int_to_ptr.vmem [resolvable:$true] %s427
          %433 = dma.hbm_to_vmem [thread:$0]  %s426, 2048, %s428, %s416, 64, 64, 4
        $region56: #{tpu_custom_call.1} parent=47 // pred_fallthru
          _
      $region48: #{tpu_custom_call.1} parent=5 // pred_fallthru
        _
      %p434 = scmp.le.s32.totalorder 1, %s29
      %p435 = scmp.lt.s32.totalorder %s29, 3
      %p436 = pnand %p434, %p435
      %p437 = pneg %p436
      // Predicated region
      $region57: #{tpu_custom_call.1} parent=5 // pred_check
        _
      $region58: #{tpu_custom_call.1} parent=5 // pred_check_branch
        %439 = sbr.rel (%p436) target = $region60
      $region59: #{tpu_custom_call.1} parent=5 // pred_region
        %s440 = ssub.s32 %s29, 1
        %s441 = sand.u32 %s42, 1
        %s442 = scalar_lea.sflag [#allocation3], %s441
        %s443 = sand.u32 %s42, 1
        %s444 = smul.addr %s443, 128
        %s445 = scalar_lea.vmem [#allocation2], %s444
        // Predicated region
        $region61: #{tpu_custom_call.1} parent=59 // pred_check
          %p446 = pneg %p55
        $region62: #{tpu_custom_call.1} parent=59 // pred_check_branch
          %448 = sbr.rel (%p446) target = $region64
        $region63: #{tpu_custom_call.1} parent=59 // pred_region
          %449 = dma.done %s442, 2048
        $region64: #{tpu_custom_call.1} parent=59 // pred_fallthru
          _
        %s450 = sand.u32 %s34, 1
        %s451 = scalar_lea.sflag [#allocation6], %s450
        %s452 = sand.u32 %s68, 1
        %s453 = smul.addr %s452, 128
        %s454 = scalar_lea.vmem [#allocation5], %s453
        // Predicated region
        $region65: #{tpu_custom_call.1} parent=59 // pred_check
          %p455 = pneg %p81
        $region66: #{tpu_custom_call.1} parent=59 // pred_check_branch
          %457 = sbr.rel (%p455) target = $region68
        $region67: #{tpu_custom_call.1} parent=59 // pred_region
          %458 = dma.done %s451, 2048
        $region68: #{tpu_custom_call.1} parent=59 // pred_fallthru
          _
        // Predicated region
        $region69: #{tpu_custom_call.1} parent=59 // pred_check
          %p459 = pneg %p102
        $region70: #{tpu_custom_call.1} parent=59 // pred_check_branch
          %461 = sbr.rel (%p459) target = $region72
        $region71: #{tpu_custom_call.1} parent=59 // pred_region
          %462 = dma.done [#allocation6], 1344
        $region72: #{tpu_custom_call.1} parent=59 // pred_fallthru
          _
        // Predicated region
        $region73: #{tpu_custom_call.1} parent=59 // pred_check
          %p463 = pneg %p123
        $region74: #{tpu_custom_call.1} parent=59 // pred_check_branch
          %465 = sbr.rel (%p463) target = $region76
        $region75: #{tpu_custom_call.1} parent=59 // pred_region
          %466 = dma.done [#allocation9], 16
        $region76: #{tpu_custom_call.1} parent=59 // pred_fallthru
          _
        // Predicated region
        $region77: #{tpu_custom_call.1} parent=59 // pred_check
          %p467 = pneg %p144
        $region78: #{tpu_custom_call.1} parent=59 // pred_check_branch
          %469 = sbr.rel (%p467) target = $region80
        $region79: #{tpu_custom_call.1} parent=59 // pred_region
          %470 = dma.done [#allocation9], 768
        $region80: #{tpu_custom_call.1} parent=59 // pred_fallthru
          _
        // Predicated region
        $region81: #{tpu_custom_call.1} parent=59 // pred_check
          %p471 = pneg %p165
        $region82: #{tpu_custom_call.1} parent=59 // pred_check_branch
          %473 = sbr.rel (%p471) target = $region84
        $region83: #{tpu_custom_call.1} parent=59 // pred_region
          %474 = dma.done [#allocation12], 16
        $region84: #{tpu_custom_call.1} parent=59 // pred_fallthru
          _
        // Predicated region
        $region85: #{tpu_custom_call.1} parent=59 // pred_check
          %p475 = pneg %p186
        $region86: #{tpu_custom_call.1} parent=59 // pred_check_branch
          %477 = sbr.rel (%p475) target = $region88
        $region87: #{tpu_custom_call.1} parent=59 // pred_region
          %478 = dma.done [#allocation12], 1024
        $region88: #{tpu_custom_call.1} parent=59 // pred_fallthru
          _
        // Predicated region
        $region89: #{tpu_custom_call.1} parent=59 // pred_check
          %p479 = pneg %p207
        $region90: #{tpu_custom_call.1} parent=59 // pred_check_branch
          %481 = sbr.rel (%p479) target = $region92
        $region91: #{tpu_custom_call.1} parent=59 // pred_region
          %482 = dma.done [#allocation15], 16
        $region92: #{tpu_custom_call.1} parent=59 // pred_fallthru
          _
        // Predicated region
        $region93: #{tpu_custom_call.1} parent=59 // pred_check
          %p483 = pneg %p228
        $region94: #{tpu_custom_call.1} parent=59 // pred_check_branch
          %485 = sbr.rel (%p483) target = $region96
        $region95: #{tpu_custom_call.1} parent=59 // pred_region
          %486 = dma.done [#allocation15], 448
        $region96: #{tpu_custom_call.1} parent=59 // pred_fallthru
          _
        // Predicated region
        $region97: #{tpu_custom_call.1} parent=59 // pred_check
          %p487 = pneg %p249
        $region98: #{tpu_custom_call.1} parent=59 // pred_check_branch
          %489 = sbr.rel (%p487) target = $region100
        $region99: #{tpu_custom_call.1} parent=59 // pred_region
          %490 = dma.done [#allocation18], 16
        $region100: #{tpu_custom_call.1} parent=59 // pred_fallthru
          _
        %s491 = sand.u32 %s42, 1
        %s492 = scalar_lea.sflag [#allocation3], %s491
        %s493 = sand.u32 %s42, 1
        %s494 = smul.addr %s493, 128
        %s495 = scalar_lea.vmem [#allocation2], %s494
        %p496 = pneg %p55
        %p497 = pneg %p52
        %s498 = sand.u32 %s34, 1
        %s499 = scalar_lea.sflag [#allocation6], %s498
        %s500 = sand.u32 %s68, 1
        %s501 = smul.addr %s500, 128
        %s502 = scalar_lea.vmem [#allocation5], %s501
        %p503 = pneg %p81
        %p504 = pneg %p78
        %p505 = pneg %p102
        %p506 = pneg %p99
        %p507 = pneg %p123
        %p508 = pneg %p120
        %p509 = pneg %p144
        %p510 = pneg %p141
        %p511 = pneg %p165
        %p512 = pneg %p162
        %p513 = pneg %p186
        %p514 = pneg %p183
        %p515 = pneg %p207
        %p516 = pneg %p204
        %p517 = pneg %p228
        %p518 = pneg %p225
        %p519 = pneg %p249
        %p520 = pneg %p246
        %p521 = pneg %p275
        %p522 = pneg %p272
        %s523 = sand.u32 %s262, 1
        %s524 = scalar_lea.sflag [#allocation4], %s523
        %s525 = sand.u32 %s262, 1
        %s526 = smul.addr %s525, 8
        %s527 = scalar_lea.vmem [#allocation19], %s526
        %s528 = smul.u32 8, %s34
        %s529 = smul.u32 8, %s34
        %v531 = vld [vmem:[%s445] sm:$0xf]
        %v532 = vld [vmem:[%s445 + $0x4] sm:$0xf]
        %v533 = vld [vmem:[%s445 + $0x8] sm:$0xf]
        %v534 = vld [vmem:[%s445 + $0xc] sm:$0xf]
        %v535 = vld [vmem:[%s445 + $0x10] sm:$0xf]
        %v536 = vld [vmem:[%s445 + $0x14] sm:$0xf]
        %v537 = vld [vmem:[%s445 + $0x18] sm:$0xf]
        %v538 = vld [vmem:[%s445 + $0x1c] sm:$0xf]
        %v539 = vld [vmem:[%s445 + $0x20] sm:$0xf]
        %v540 = vld [vmem:[%s445 + $0x24] sm:$0xf]
        %v541 = vld [vmem:[%s445 + $0x28] sm:$0xf]
        %v542 = vld [vmem:[%s445 + $0x2c] sm:$0xf]
        %v543 = vld [vmem:[%s445 + $0x30] sm:$0xf]
        %v544 = vld [vmem:[%s445 + $0x34] sm:$0xf]
        %v545 = vld [vmem:[%s445 + $0x38] sm:$0xf]
        %v546 = vld [vmem:[%s445 + $0x3c] sm:$0xf]
        %v547 = vld [vmem:[%s445 + $0x40] sm:$0xf]
        %v548 = vld [vmem:[%s445 + $0x44] sm:$0xf]
        %v549 = vld [vmem:[%s445 + $0x48] sm:$0xf]
        %v550 = vld [vmem:[%s445 + $0x4c] sm:$0xf]
        %v551 = vld [vmem:[%s445 + $0x50] sm:$0xf]
        %v552 = vld [vmem:[%s445 + $0x54] sm:$0xf]
        %v553 = vld [vmem:[%s445 + $0x58] sm:$0xf]
        %v554 = vld [vmem:[%s445 + $0x5c] sm:$0xf]
        %v555 = vld [vmem:[%s445 + $0x60] sm:$0xf]
        %v556 = vld [vmem:[%s445 + $0x64] sm:$0xf]
        %v557 = vld [vmem:[%s445 + $0x68] sm:$0xf]
        %v558 = vld [vmem:[%s445 + $0x6c] sm:$0xf]
        %v559 = vld [vmem:[%s445 + $0x70] sm:$0xf]
        %v560 = vld [vmem:[%s445 + $0x74] sm:$0xf]
        %v561 = vld [vmem:[%s445 + $0x78] sm:$0xf]
        %v562 = vld [vmem:[%s445 + $0x7c] sm:$0xf]
        %v563 = vld [vmem:[%s454] sm:$0xf]
        %v564 = vld [vmem:[%s454 + $0x4] sm:$0xf]
        %v565 = vld [vmem:[%s454 + $0x8] sm:$0xf]
        %v566 = vld [vmem:[%s454 + $0xc] sm:$0xf]
        %v567 = vld [vmem:[%s454 + $0x10] sm:$0xf]
        %v568 = vld [vmem:[%s454 + $0x14] sm:$0xf]
        %v569 = vld [vmem:[%s454 + $0x18] sm:$0xf]
        %v570 = vld [vmem:[%s454 + $0x1c] sm:$0xf]
        %v571 = vld [vmem:[%s454 + $0x20] sm:$0xf]
        %v572 = vld [vmem:[%s454 + $0x24] sm:$0xf]
        %v573 = vld [vmem:[%s454 + $0x28] sm:$0xf]
        %v574 = vld [vmem:[%s454 + $0x2c] sm:$0xf]
        %v575 = vld [vmem:[%s454 + $0x30] sm:$0xf]
        %v576 = vld [vmem:[%s454 + $0x34] sm:$0xf]
        %v577 = vld [vmem:[%s454 + $0x38] sm:$0xf]
        %v578 = vld [vmem:[%s454 + $0x3c] sm:$0xf]
        %v579 = vld [vmem:[%s454 + $0x40] sm:$0xf]
        %v580 = vld [vmem:[%s454 + $0x44] sm:$0xf]
        %v581 = vld [vmem:[%s454 + $0x48] sm:$0xf]
        %v582 = vld [vmem:[%s454 + $0x4c] sm:$0xf]
        %v583 = vld [vmem:[%s454 + $0x50] sm:$0xf]
        %v584 = vld [vmem:[%s454 + $0x54] sm:$0xf]
        %v585 = vld [vmem:[%s454 + $0x58] sm:$0xf]
        %v586 = vld [vmem:[%s454 + $0x5c] sm:$0xf]
        %v587 = vld [vmem:[%s454 + $0x60] sm:$0xf]
        %v588 = vld [vmem:[%s454 + $0x64] sm:$0xf]
        %v589 = vld [vmem:[%s454 + $0x68] sm:$0xf]
        %v590 = vld [vmem:[%s454 + $0x6c] sm:$0xf]
        %v591 = vld [vmem:[%s454 + $0x70] sm:$0xf]
        %v592 = vld [vmem:[%s454 + $0x74] sm:$0xf]
        %v593 = vld [vmem:[%s454 + $0x78] sm:$0xf]
        %v594 = vld [vmem:[%s454 + $0x7c] sm:$0xf]
        %v595 = vld [vmem:[#allocation7] sm:$0xf]
        %v596 = vld [vmem:[#allocation7 + $0x4] sm:$0xf]
        %v597 = vld [vmem:[#allocation7 + $0x8] sm:$0xf]
        %v598 = vld [vmem:[#allocation7 + $0xc] sm:$0xf]
        %v599 = vld [vmem:[#allocation7 + $0x10] sm:$0xf]
        %v600 = vld [vmem:[#allocation7 + $0x14] sm:$0xf]
        %v601 = vld [vmem:[#allocation7 + $0x18] sm:$0x1]
        %v634 = vunpack.c.l.b16 %v531
        %v635 = vunpack.c.l.b16 %v532
        %v636 = vunpack.c.l.b16 %v533
        %v637 = vunpack.c.l.b16 %v534
        %v638 = vunpack.c.l.b16 %v535
        %v639 = vunpack.c.l.b16 %v536
        %v640 = vunpack.c.l.b16 %v537
        %v641 = vunpack.c.l.b16 %v538
        %v642 = vunpack.c.l.b16 %v539
        %v643 = vunpack.c.l.b16 %v540
        %v644 = vunpack.c.l.b16 %v541
        %v645 = vunpack.c.l.b16 %v542
        %v646 = vunpack.c.l.b16 %v543
        %v647 = vunpack.c.l.b16 %v544
        %v648 = vunpack.c.l.b16 %v545
        %v649 = vunpack.c.l.b16 %v546
        %v650 = vunpack.c.l.b16 %v547
        %v651 = vunpack.c.l.b16 %v548
        %v652 = vunpack.c.l.b16 %v549
        %v653 = vunpack.c.l.b16 %v550
        %v654 = vunpack.c.l.b16 %v551
        %v655 = vunpack.c.l.b16 %v552
        %v656 = vunpack.c.l.b16 %v553
        %v657 = vunpack.c.l.b16 %v554
        %v658 = vunpack.c.l.b16 %v555
        %v659 = vunpack.c.l.b16 %v556
        %v660 = vunpack.c.l.b16 %v557
        %v661 = vunpack.c.l.b16 %v558
        %v662 = vunpack.c.l.b16 %v559
        %v663 = vunpack.c.l.b16 %v560
        %v664 = vunpack.c.l.b16 %v561
        %v665 = vunpack.c.l.b16 %v562
        %v666 = vpack.c.b16 %v635, %v634
        %v667 = vpack.c.b16 %v637, %v636
        %v668 = vpack.c.b16 %v639, %v638
        %v669 = vpack.c.b16 %v641, %v640
        %v670 = vpack.c.b16 %v643, %v642
        %v671 = vpack.c.b16 %v645, %v644
        %v672 = vpack.c.b16 %v647, %v646
        %v673 = vpack.c.b16 %v649, %v648
        %v674 = vpack.c.b16 %v651, %v650
        %v675 = vpack.c.b16 %v653, %v652
        %v676 = vpack.c.b16 %v655, %v654
        %v677 = vpack.c.b16 %v657, %v656
        %v678 = vpack.c.b16 %v659, %v658
        %v679 = vpack.c.b16 %v661, %v660
        %v680 = vpack.c.b16 %v663, %v662
        %v681 = vpack.c.b16 %v665, %v664
        %v689 = vunpack.c.l.b16 %v595
        %v690 = vunpack.c.l.b16 %v596
        %v691 = vunpack.c.l.b16 %v597
        %v692 = vunpack.c.l.b16 %v598
        %v693 = vunpack.c.l.b16 %v599
        %v694 = vunpack.c.l.b16 %v600
        %v695 = vunpack.c.l.b16 %v601
        %v696 = vpack.c.b16 %v690, %v689
        %v697 = vpack.c.b16 %v692, %v691
        %v698 = vpack.c.b16 %v694, %v693
        %v699 = vpack.c.b16 %v695, %v695
        %vm703 = vcmask 408576
        %v705 = vsel %vm703, %v666, 0
        %v708 = vsel %vm703, %v667, 0
        %v711 = vsel %vm703, %v668, 0
        %v714 = vsel %vm703, %v669, 0
        %v717 = vsel %vm703, %v670, 0
        %v720 = vsel %vm703, %v671, 0
        %v723 = vsel %vm703, %v672, 0
        %v726 = vsel %vm703, %v673, 0
        %v729 = vsel %vm703, %v674, 0
        %v732 = vsel %vm703, %v675, 0
        %v735 = vsel %vm703, %v676, 0
        %v738 = vsel %vm703, %v677, 0
        %v741 = vsel %vm703, %v678, 0
        %v744 = vsel %vm703, %v679, 0
        %v747 = vsel %vm703, %v680, 0
        %v750 = vsel %vm703, %v681, 0
        %vm752 = vcmask 1040384
        %v754 = vsel %vm752, %v699, 0
        %756 = vmatprep.subr.bf16.mxu0 0
        %757 = vmatpush1.bf16.msra.mxu0 %v696
        %758 = vmatprep.subr.bf16.mxu0 0
        %759 = vmatpush1.bf16.msra.mxu0 %v697
        %760 = vmatprep.subr.bf16.mxu0 0
        %761 = vmatpush1.bf16.msra.mxu0 %v698
        %762 = vmatprep.subr.bf16.mxu0 0
        %763 = vmatpush1.bf16.msra.mxu0 %v754
        %764 = vmatprep.subr.bf16.mxu0 0
        %765 = vmatpush1.bf16.msra.mxu0 0
        %766 = vmatprep.subr.bf16.mxu0 0
        %767 = vmatpush1.bf16.msra.mxu0 0
        %768 = vmatprep.subr.bf16.mxu0 0
        %769 = vmatpush1.bf16.msra.mxu0 0
        %770 = vmatprep.subr.bf16.mxu0 0
        %771 = vmatpush1.bf16.msra.mxu0 0
        %772 = vmatprep.subr.bf16.mxu0 0
        %773 = vmatpush1.bf16.msra.mxu0 0
        %774 = vmatprep.subr.bf16.mxu0 0
        %775 = vmatpush1.bf16.msra.mxu0 0
        %776 = vmatprep.subr.bf16.mxu0 0
        %777 = vmatpush1.bf16.msra.mxu0 0
        %778 = vmatprep.subr.bf16.mxu0 0
        %779 = vmatpush1.bf16.msra.mxu0 0
        %780 = vmatprep.subr.bf16.mxu0 0
        %781 = vmatpush1.bf16.msra.mxu0 0
        %782 = vmatprep.subr.bf16.mxu0 0
        %783 = vmatpush1.bf16.msra.mxu0 0
        %784 = vmatprep.subr.bf16.mxu0 0
        %785 = vmatpush1.bf16.msra.mxu0 0
        %786 = vmatprep.subr.bf16.mxu0 0
        %787 = vmatpush1.bf16.msra.mxu0 0
        %788 = vmatprep.mubr.bf16.mxu0 0
        %789 = vmatmul.mubr.bf16.gmra.mrb[0].mxu0 %v705
        %v790 = vpop.f32.mrb[0].mxu0
        %v791 = vadd.f32 0.0, %v790
        %v792 = vpop.f32.mrb[0].mxu0
        %v793 = vpop.f32.mrb[0].mxu0
        %v794 = vadd.f32 0.0, %v793
        %v795 = vpop.f32.mrb[0].mxu0
        %796 = vmatprep.mubr.bf16.mxu0 0
        %797 = vmatmul.mubr.bf16.gmra.mrb[0].mxu0 %v708
        %v798 = vpop.f32.mrb[0].mxu0
        %v799 = vpop.f32.mrb[0].mxu0
        %v800 = vpop.f32.mrb[0].mxu0
        %v801 = vpop.f32.mrb[0].mxu0
        %802 = vmatprep.mubr.bf16.mxu0 0
        %803 = vmatmul.mubr.bf16.gmra.mrb[0].mxu0 %v711
        %v804 = vpop.f32.mrb[0].mxu0
        %v805 = vadd.f32 0.0, %v804
        %v806 = vpop.f32.mrb[0].mxu0
        %v807 = vpop.f32.mrb[0].mxu0
        %v808 = vadd.f32 0.0, %v807
        %v809 = vpop.f32.mrb[0].mxu0
        %810 = vmatprep.mubr.bf16.mxu0 0
        %811 = vmatmul.mubr.bf16.gmra.mrb[0].mxu0 %v714
        %v812 = vpop.f32.mrb[0].mxu0
        %v813 = vpop.f32.mrb[0].mxu0
        %v814 = vpop.f32.mrb[0].mxu0
        %v815 = vpop.f32.mrb[0].mxu0
        %816 = vmatprep.mubr.bf16.mxu0 0
        %817 = vmatmul.mubr.bf16.gmra.mrb[0].mxu0 %v717
        %v818 = vpop.f32.mrb[0].mxu0
        %v819 = vadd.f32 0.0, %v818
        %v820 = vpop.f32.mrb[0].mxu0
        %v821 = vpop.f32.mrb[0].mxu0
        %v822 = vadd.f32 0.0, %v821
        %v823 = vpop.f32.mrb[0].mxu0
        %824 = vmatprep.mubr.bf16.mxu0 0
        %825 = vmatmul.mubr.bf16.gmra.mrb[0].mxu0 %v720
        %v826 = vpop.f32.mrb[0].mxu0
        %v827 = vpop.f32.mrb[0].mxu0
        %v828 = vpop.f32.mrb[0].mxu0
        %v829 = vpop.f32.mrb[0].mxu0
        %830 = vmatprep.mubr.bf16.mxu0 0
        %831 = vmatmul.mubr.bf16.gmra.mrb[0].mxu0 %v723
        %v832 = vpop.f32.mrb[0].mxu0
        %v833 = vadd.f32 0.0, %v832
        %v834 = vpop.f32.mrb[0].mxu0
        %v835 = vpop.f32.mrb[0].mxu0
        %v836 = vadd.f32 0.0, %v835
        %v837 = vpop.f32.mrb[0].mxu0
        %838 = vmatprep.mubr.bf16.mxu0 0
        %839 = vmatmul.mubr.bf16.gmra.mrb[0].mxu0 %v726
        %v840 = vpop.f32.mrb[0].mxu0
        %v841 = vpop.f32.mrb[0].mxu0
        %v842 = vpop.f32.mrb[0].mxu0
        %v843 = vpop.f32.mrb[0].mxu0
        %844 = vmatprep.mubr.bf16.mxu0 0
        %845 = vmatmul.mubr.bf16.gmra.mrb[0].mxu0 %v729
        %v846 = vpop.f32.mrb[0].mxu0
        %v847 = vadd.f32 0.0, %v846
        %v848 = vpop.f32.mrb[0].mxu0
        %v849 = vpop.f32.mrb[0].mxu0
        %v850 = vadd.f32 0.0, %v849
        %v851 = vpop.f32.mrb[0].mxu0
        %852 = vmatprep.mubr.bf16.mxu0 0
        %853 = vmatmul.mubr.bf16.gmra.mrb[0].mxu0 %v732
        %v854 = vpop.f32.mrb[0].mxu0
        %v855 = vpop.f32.mrb[0].mxu0
        %v856 = vpop.f32.mrb[0].mxu0
        %v857 = vpop.f32.mrb[0].mxu0
        %858 = vmatprep.mubr.bf16.mxu0 0
        %859 = vmatmul.mubr.bf16.gmra.mrb[0].mxu0 %v735
        %v860 = vpop.f32.mrb[0].mxu0
        %v861 = vadd.f32 0.0, %v860
        %v862 = vpop.f32.mrb[0].mxu0
        %v863 = vpop.f32.mrb[0].mxu0
        %v864 = vadd.f32 0.0, %v863
        %v865 = vpop.f32.mrb[0].mxu0
        %866 = vmatprep.mubr.bf16.mxu0 0
        %867 = vmatmul.mubr.bf16.gmra.mrb[0].mxu0 %v738
        %v868 = vpop.f32.mrb[0].mxu0
        %v869 = vpop.f32.mrb[0].mxu0
        %v870 = vpop.f32.mrb[0].mxu0
        %v871 = vpop.f32.mrb[0].mxu0
        %872 = vmatprep.mubr.bf16.mxu0 0
        %873 = vmatmul.mubr.bf16.gmra.mrb[0].mxu0 %v741
        %v874 = vpop.f32.mrb[0].mxu0
        %v875 = vadd.f32 0.0, %v874
        %v876 = vpop.f32.mrb[0].mxu0
        %v877 = vpop.f32.mrb[0].mxu0
        %v878 = vadd.f32 0.0, %v877
        %v879 = vpop.f32.mrb[0].mxu0
        %880 = vmatprep.mubr.bf16.mxu0 0
        %881 = vmatmul.mubr.bf16.gmra.mrb[0].mxu0 %v744
        %v882 = vpop.f32.mrb[0].mxu0
        %v883 = vpop.f32.mrb[0].mxu0
        %v884 = vpop.f32.mrb[0].mxu0
        %v885 = vpop.f32.mrb[0].mxu0
        %886 = vmatprep.mubr.bf16.mxu0 0
        %887 = vmatmul.mubr.bf16.gmra.mrb[0].mxu0 %v747
        %v888 = vpop.f32.mrb[0].mxu0
        %v889 = vadd.f32 0.0, %v888
        %v890 = vpop.f32.mrb[0].mxu0
        %v891 = vpop.f32.mrb[0].mxu0
        %v892 = vadd.f32 0.0, %v891
        %v893 = vpop.f32.mrb[0].mxu0
        %894 = vmatprep.mubr.bf16.mxu0 0
        %895 = vmatmul.mubr.bf16.gmra.mrb[0].mxu0 %v750
        %v896 = vpop.f32.mrb[0].mxu0
        %v897 = vpop.f32.mrb[0].mxu0
        %v898 = vpop.f32.mrb[0].mxu0
        %v899 = vpop.f32.mrb[0].mxu0
        %900 = vdwg.mxu0
        %s901 = scalar_lea.vmem [#allocation7], 28
        %v902 = vld [vmem:[%s901] sm:$0xf]
        %v903 = vld [vmem:[%s901 + $0x4] sm:$0xf]
        %v904 = vld [vmem:[%s901 + $0x8] sm:$0xf]
        %v905 = vld [vmem:[%s901 + $0xc] sm:$0xf]
        %v906 = vld [vmem:[%s901 + $0x10] sm:$0xf]
        %v907 = vld [vmem:[%s901 + $0x14] sm:$0xf]
        %v908 = vld [vmem:[%s901 + $0x18] sm:$0x1]
        %v941 = vunpack.c.l.b16 %v563
        %v942 = vunpack.c.l.b16 %v564
        %v943 = vunpack.c.l.b16 %v565
        %v944 = vunpack.c.l.b16 %v566
        %v945 = vunpack.c.l.b16 %v567
        %v946 = vunpack.c.l.b16 %v568
        %v947 = vunpack.c.l.b16 %v569
        %v948 = vunpack.c.l.b16 %v570
        %v949 = vunpack.c.l.b16 %v571
        %v950 = vunpack.c.l.b16 %v572
        %v951 = vunpack.c.l.b16 %v573
        %v952 = vunpack.c.l.b16 %v574
        %v953 = vunpack.c.l.b16 %v575
        %v954 = vunpack.c.l.b16 %v576
        %v955 = vunpack.c.l.b16 %v577
        %v956 = vunpack.c.l.b16 %v578
        %v957 = vunpack.c.l.b16 %v579
        %v958 = vunpack.c.l.b16 %v580
        %v959 = vunpack.c.l.b16 %v581
        %v960 = vunpack.c.l.b16 %v582
        %v961 = vunpack.c.l.b16 %v583
        %v962 = vunpack.c.l.b16 %v584
        %v963 = vunpack.c.l.b16 %v585
        %v964 = vunpack.c.l.b16 %v586
        %v965 = vunpack.c.l.b16 %v587
        %v966 = vunpack.c.l.b16 %v588
        %v967 = vunpack.c.l.b16 %v589
        %v968 = vunpack.c.l.b16 %v590
        %v969 = vunpack.c.l.b16 %v591
        %v970 = vunpack.c.l.b16 %v592
        %v971 = vunpack.c.l.b16 %v593
        %v972 = vunpack.c.l.b16 %v594
        %v973 = vpack.c.b16 %v942, %v941
        %v974 = vpack.c.b16 %v944, %v943
        %v975 = vpack.c.b16 %v946, %v945
        %v976 = vpack.c.b16 %v948, %v947
        %v977 = vpack.c.b16 %v950, %v949
        %v978 = vpack.c.b16 %v952, %v951
        %v979 = vpack.c.b16 %v954, %v953
        %v980 = vpack.c.b16 %v956, %v955
        %v981 = vpack.c.b16 %v958, %v957
        %v982 = vpack.c.b16 %v960, %v959
        %v983 = vpack.c.b16 %v962, %v961
        %v984 = vpack.c.b16 %v964, %v963
        %v985 = vpack.c.b16 %v966, %v965
        %v986 = vpack.c.b16 %v968, %v967
        %v987 = vpack.c.b16 %v970, %v969
        %v988 = vpack.c.b16 %v972, %v971
        %v996 = vunpack.c.l.b16 %v902
        %v997 = vunpack.c.l.b16 %v903
        %v998 = vunpack.c.l.b16 %v904
        %v999 = vunpack.c.l.b16 %v905
        %v1000 = vunpack.c.l.b16 %v906
        %v1001 = vunpack.c.l.b16 %v907
        %v1002 = vunpack.c.l.b16 %v908
        %v1003 = vpack.c.b16 %v997, %v996
        %v1004 = vpack.c.b16 %v999, %v998
        %v1005 = vpack.c.b16 %v1001, %v1000
        %v1006 = vpack.c.b16 %v1002, %v1002
        %v1011 = vsel %vm703, %v973, 0
        %v1014 = vsel %vm703, %v974, 0
        %v1017 = vsel %vm703, %v975, 0
        %v1020 = vsel %vm703, %v976, 0
        %v1023 = vsel %vm703, %v977, 0
        %v1026 = vsel %vm703, %v978, 0
        %v1029 = vsel %vm703, %v979, 0
        %v1032 = vsel %vm703, %v980, 0
        %v1035 = vsel %vm703, %v981, 0
        %v1038 = vsel %vm703, %v982, 0
        %v1041 = vsel %vm703, %v983, 0
        %v1044 = vsel %vm703, %v984, 0
        %v1047 = vsel %vm703, %v985, 0
        %v1050 = vsel %vm703, %v986, 0
        %v1053 = vsel %vm703, %v987, 0
        %v1056 = vsel %vm703, %v988, 0
        %v1059 = vsel %vm752, %v1006, 0
        %1061 = vmatprep.subr.bf16.mxu0 0
        %1062 = vmatpush1.bf16.msra.mxu0 %v1003
        %1063 = vmatprep.subr.bf16.mxu0 0
        %1064 = vmatpush1.bf16.msra.mxu0 %v1004
        %1065 = vmatprep.subr.bf16.mxu0 0
        %1066 = vmatpush1.bf16.msra.mxu0 %v1005
        %1067 = vmatprep.subr.bf16.mxu0 0
        %1068 = vmatpush1.bf16.msra.mxu0 %v1059
        %1069 = vmatprep.subr.bf16.mxu0 0
        %1070 = vmatpush1.bf16.msra.mxu0 0
        %1071 = vmatprep.subr.bf16.mxu0 0
        %1072 = vmatpush1.bf16.msra.mxu0 0
        %1073 = vmatprep.subr.bf16.mxu0 0
        %1074 = vmatpush1.bf16.msra.mxu0 0
        %1075 = vmatprep.subr.bf16.mxu0 0
        %1076 = vmatpush1.bf16.msra.mxu0 0
        %1077 = vmatprep.subr.bf16.mxu0 0
        %1078 = vmatpush1.bf16.msra.mxu0 0
        %1079 = vmatprep.subr.bf16.mxu0 0
        %1080 = vmatpush1.bf16.msra.mxu0 0
        %1081 = vmatprep.subr.bf16.mxu0 0
        %1082 = vmatpush1.bf16.msra.mxu0 0
        %1083 = vmatprep.subr.bf16.mxu0 0
        %1084 = vmatpush1.bf16.msra.mxu0 0
        %1085 = vmatprep.subr.bf16.mxu0 0
        %1086 = vmatpush1.bf16.msra.mxu0 0
        %1087 = vmatprep.subr.bf16.mxu0 0
        %1088 = vmatpush1.bf16.msra.mxu0 0
        %1089 = vmatprep.subr.bf16.mxu0 0
        %1090 = vmatpush1.bf16.msra.mxu0 0
        %1091 = vmatprep.subr.bf16.mxu0 0
        %1092 = vmatpush1.bf16.msra.mxu0 0
        %1093 = vmatprep.mubr.bf16.mxu0 0
        %1094 = vmatmul.mubr.bf16.gmra.mrb[0].mxu0 %v1011
        %v1095 = vpop.f32.mrb[0].mxu0
        %v1096 = vadd.f32 0.0, %v1095
        %v1097 = vpop.f32.mrb[0].mxu0
        %v1098 = vpop.f32.mrb[0].mxu0
        %v1099 = vadd.f32 0.0, %v1098
        %v1100 = vpop.f32.mrb[0].mxu0
        %1101 = vmatprep.mubr.bf16.mxu0 0
        %1102 = vmatmul.mubr.bf16.gmra.mrb[0].mxu0 %v1014
        %v1103 = vpop.f32.mrb[0].mxu0
        %v1104 = vpop.f32.mrb[0].mxu0
        %v1105 = vpop.f32.mrb[0].mxu0
        %v1106 = vpop.f32.mrb[0].mxu0
        %1107 = vmatprep.mubr.bf16.mxu0 0
        %1108 = vmatmul.mubr.bf16.gmra.mrb[0].mxu0 %v1017
        %v1109 = vpop.f32.mrb[0].mxu0
        %v1110 = vadd.f32 0.0, %v1109
        %v1111 = vpop.f32.mrb[0].mxu0
        %v1112 = vpop.f32.mrb[0].mxu0
        %v1113 = vadd.f32 0.0, %v1112
        %v1114 = vpop.f32.mrb[0].mxu0
        %1115 = vmatprep.mubr.bf16.mxu0 0
        %1116 = vmatmul.mubr.bf16.gmra.mrb[0].mxu0 %v1020
        %v1117 = vpop.f32.mrb[0].mxu0
        %v1118 = vpop.f32.mrb[0].mxu0
        %v1119 = vpop.f32.mrb[0].mxu0
        %v1120 = vpop.f32.mrb[0].mxu0
        %1121 = vmatprep.mubr.bf16.mxu0 0
        %1122 = vmatmul.mubr.bf16.gmra.mrb[0].mxu0 %v1023
        %v1123 = vpop.f32.mrb[0].mxu0
        %v1124 = vadd.f32 0.0, %v1123
        %v1125 = vpop.f32.mrb[0].mxu0
        %v1126 = vpop.f32.mrb[0].mxu0
        %v1127 = vadd.f32 0.0, %v1126
        %v1128 = vpop.f32.mrb[0].mxu0
        %1129 = vmatprep.mubr.bf16.mxu0 0
        %1130 = vmatmul.mubr.bf16.gmra.mrb[0].mxu0 %v1026
        %v1131 = vpop.f32.mrb[0].mxu0
        %v1132 = vpop.f32.mrb[0].mxu0
        %v1133 = vpop.f32.mrb[0].mxu0
        %v1134 = vpop.f32.mrb[0].mxu0
        %1135 = vmatprep.mubr.bf16.mxu0 0
        %1136 = vmatmul.mubr.bf16.gmra.mrb[0].mxu0 %v1029
        %v1137 = vpop.f32.mrb[0].mxu0
        %v1138 = vadd.f32 0.0, %v1137
        %v1139 = vpop.f32.mrb[0].mxu0
        %v1140 = vpop.f32.mrb[0].mxu0
        %v1141 = vadd.f32 0.0, %v1140
        %v1142 = vpop.f32.mrb[0].mxu0
        %1143 = vmatprep.mubr.bf16.mxu0 0
        %1144 = vmatmul.mubr.bf16.gmra.mrb[0].mxu0 %v1032
        %v1145 = vpop.f32.mrb[0].mxu0
        %v1146 = vpop.f32.mrb[0].mxu0
        %v1147 = vpop.f32.mrb[0].mxu0
        %v1148 = vpop.f32.mrb[0].mxu0
        %1149 = vmatprep.mubr.bf16.mxu0 0
        %1150 = vmatmul.mubr.bf16.gmra.mrb[0].mxu0 %v1035
        %v1151 = vpop.f32.mrb[0].mxu0
        %v1152 = vadd.f32 0.0, %v1151
        %v1153 = vpop.f32.mrb[0].mxu0
        %v1154 = vpop.f32.mrb[0].mxu0
        %v1155 = vadd.f32 0.0, %v1154
        %v1156 = vpop.f32.mrb[0].mxu0
        %1157 = vmatprep.mubr.bf16.mxu0 0
        %1158 = vmatmul.mubr.bf16.gmra.mrb[0].mxu0 %v1038
        %v1159 = vpop.f32.mrb[0].mxu0
        %v1160 = vpop.f32.mrb[0].mxu0
        %v1161 = vpop.f32.mrb[0].mxu0
        %v1162 = vpop.f32.mrb[0].mxu0
        %1163 = vmatprep.mubr.bf16.mxu0 0
        %1164 = vmatmul.mubr.bf16.gmra.mrb[0].mxu0 %v1041
        %v1165 = vpop.f32.mrb[0].mxu0
        %v1166 = vadd.f32 0.0, %v1165
        %v1167 = vpop.f32.mrb[0].mxu0
        %v1168 = vpop.f32.mrb[0].mxu0
        %v1169 = vadd.f32 0.0, %v1168
        %v1170 = vpop.f32.mrb[0].mxu0
        %1171 = vmatprep.mubr.bf16.mxu0 0
        %1172 = vmatmul.mubr.bf16.gmra.mrb[0].mxu0 %v1044
        %v1173 = vpop.f32.mrb[0].mxu0
        %v1174 = vpop.f32.mrb[0].mxu0
        %v1175 = vpop.f32.mrb[0].mxu0
        %v1176 = vpop.f32.mrb[0].mxu0
        %1177 = vmatprep.mubr.bf16.mxu0 0
        %1178 = vmatmul.mubr.bf16.gmra.mrb[0].mxu0 %v1047
        %v1179 = vpop.f32.mrb[0].mxu0
        %v1180 = vadd.f32 0.0, %v1179
        %v1181 = vpop.f32.mrb[0].mxu0
        %v1182 = vpop.f32.mrb[0].mxu0
        %v1183 = vadd.f32 0.0, %v1182
        %v1184 = vpop.f32.mrb[0].mxu0
        %1185 = vmatprep.mubr.bf16.mxu0 0
        %1186 = vmatmul.mubr.bf16.gmra.mrb[0].mxu0 %v1050
        %v1187 = vpop.f32.mrb[0].mxu0
        %v1188 = vpop.f32.mrb[0].mxu0
        %v1189 = vpop.f32.mrb[0].mxu0
        %v1190 = vpop.f32.mrb[0].mxu0
        %1191 = vmatprep.mubr.bf16.mxu0 0
        %1192 = vmatmul.mubr.bf16.gmra.mrb[0].mxu0 %v1053
        %v1193 = vpop.f32.mrb[0].mxu0
        %v1194 = vadd.f32 0.0, %v1193
        %v1195 = vpop.f32.mrb[0].mxu0
        %v1196 = vpop.f32.mrb[0].mxu0
        %v1197 = vadd.f32 0.0, %v1196
        %v1198 = vpop.f32.mrb[0].mxu0
        %1199 = vmatprep.mubr.bf16.mxu0 0
        %1200 = vmatmul.mubr.bf16.gmra.mrb[0].mxu0 %v1056
        %v1201 = vpop.f32.mrb[0].mxu0
        %v1202 = vpop.f32.mrb[0].mxu0
        %v1203 = vpop.f32.mrb[0].mxu0
        %v1204 = vpop.f32.mrb[0].mxu0
        %1205 = vdwg.mxu0
        %v1206 = vadd.f32 %v791, %v1096
        %v1207 = vadd.f32 %v794, %v1099
        %v1208 = vadd.f32 %v805, %v1110
        %v1209 = vadd.f32 %v808, %v1113
        %v1210 = vadd.f32 %v819, %v1124
        %v1211 = vadd.f32 %v822, %v1127
        %v1212 = vadd.f32 %v833, %v1138
        %v1213 = vadd.f32 %v836, %v1141
        %v1214 = vadd.f32 %v847, %v1152
        %v1215 = vadd.f32 %v850, %v1155
        %v1216 = vadd.f32 %v861, %v1166
        %v1217 = vadd.f32 %v864, %v1169
        %v1218 = vadd.f32 %v875, %v1180
        %v1219 = vadd.f32 %v878, %v1183
        %v1220 = vadd.f32 %v889, %v1194
        %v1221 = vadd.f32 %v892, %v1197
        %s1222 = scalar_lea.vmem [#allocation7], 56
        %v1223 = vld [vmem:[%s1222] sm:$0xf]
        %v1224 = vld [vmem:[%s1222 + $0x4] sm:$0xf]
        %v1225 = vld [vmem:[%s1222 + $0x8] sm:$0xf]
        %v1226 = vld [vmem:[%s1222 + $0xc] sm:$0xf]
        %v1227 = vld [vmem:[%s1222 + $0x10] sm:$0xf]
        %v1228 = vld [vmem:[%s1222 + $0x14] sm:$0xf]
        %v1229 = vld [vmem:[%s1222 + $0x18] sm:$0x1]
        %v1237 = vunpack.c.l.b16 %v1223
        %v1238 = vunpack.c.l.b16 %v1224
        %v1239 = vunpack.c.l.b16 %v1225
        %v1240 = vunpack.c.l.b16 %v1226
        %v1241 = vunpack.c.l.b16 %v1227
        %v1242 = vunpack.c.l.b16 %v1228
        %v1243 = vunpack.c.l.b16 %v1229
        %v1244 = vpack.c.b16 %v1238, %v1237
        %v1245 = vpack.c.b16 %v1240, %v1239
        %v1246 = vpack.c.b16 %v1242, %v1241
        %v1247 = vpack.c.b16 %v1243, %v1243
        %v1252 = vsel %vm752, %v1247, 0
        %1254 = vmatprep.subr.bf16.mxu0 0
        %1255 = vmatpush1.bf16.msra.mxu0 %v1244
        %1256 = vmatprep.subr.bf16.mxu0 0
        %1257 = vmatpush1.bf16.msra.mxu0 %v1245
        %1258 = vmatprep.subr.bf16.mxu0 0
        %1259 = vmatpush1.bf16.msra.mxu0 %v1246
        %1260 = vmatprep.subr.bf16.mxu0 0
        %1261 = vmatpush1.bf16.msra.mxu0 %v1252
        %1262 = vmatprep.subr.bf16.mxu0 0
        %1263 = vmatpush1.bf16.msra.mxu0 0
        %1264 = vmatprep.subr.bf16.mxu0 0
        %1265 = vmatpush1.bf16.msra.mxu0 0
        %1266 = vmatprep.subr.bf16.mxu0 0
        %1267 = vmatpush1.bf16.msra.mxu0 0
        %1268 = vmatprep.subr.bf16.mxu0 0
        %1269 = vmatpush1.bf16.msra.mxu0 0
        %1270 = vmatprep.subr.bf16.mxu0 0
        %1271 = vmatpush1.bf16.msra.mxu0 0
        %1272 = vmatprep.subr.bf16.mxu0 0
        %1273 = vmatpush1.bf16.msra.mxu0 0
        %1274 = vmatprep.subr.bf16.mxu0 0
        %1275 = vmatpush1.bf16.msra.mxu0 0
        %1276 = vmatprep.subr.bf16.mxu0 0
        %1277 = vmatpush1.bf16.msra.mxu0 0
        %1278 = vmatprep.subr.bf16.mxu0 0
        %1279 = vmatpush1.bf16.msra.mxu0 0
        %1280 = vmatprep.subr.bf16.mxu0 0
        %1281 = vmatpush1.bf16.msra.mxu0 0
        %1282 = vmatprep.subr.bf16.mxu0 0
        %1283 = vmatpush1.bf16.msra.mxu0 0
        %1284 = vmatprep.subr.bf16.mxu0 0
        %1285 = vmatpush1.bf16.msra.mxu0 0
        %1286 = vmatprep.mubr.bf16.mxu0 0
        %1287 = vmatmul.mubr.bf16.gmra.mrb[0].mxu0 %v705
        %v1288 = vpop.f32.mrb[0].mxu0
        %v1289 = vadd.f32 0.0, %v1288
        %v1290 = vpop.f32.mrb[0].mxu0
        %v1291 = vpop.f32.mrb[0].mxu0
        %v1292 = vadd.f32 0.0, %v1291
        %v1293 = vpop.f32.mrb[0].mxu0
        %1294 = vmatprep.mubr.bf16.mxu0 0
        %1295 = vmatmul.mubr.bf16.gmra.mrb[0].mxu0 %v708
        %v1296 = vpop.f32.mrb[0].mxu0
        %v1297 = vadd.f32 0.0, %v1296
        %v1298 = vpop.f32.mrb[0].mxu0
        %v1299 = vpop.f32.mrb[0].mxu0
        %v1300 = vpop.f32.mrb[0].mxu0
        %1301 = vmatprep.mubr.bf16.mxu0 0
        %1302 = vmatmul.mubr.bf16.gmra.mrb[0].mxu0 %v711
        %v1303 = vpop.f32.mrb[0].mxu0
        %v1304 = vadd.f32 0.0, %v1303
        %v1305 = vpop.f32.mrb[0].mxu0
        %v1306 = vpop.f32.mrb[0].mxu0
        %v1307 = vadd.f32 0.0, %v1306
        %v1308 = vpop.f32.mrb[0].mxu0
        %1309 = vmatprep.mubr.bf16.mxu0 0
        %1310 = vmatmul.mubr.bf16.gmra.mrb[0].mxu0 %v714
        %v1311 = vpop.f32.mrb[0].mxu0
        %v1312 = vadd.f32 0.0, %v1311
        %v1313 = vpop.f32.mrb[0].mxu0
        %v1314 = vpop.f32.mrb[0].mxu0
        %v1315 = vpop.f32.mrb[0].mxu0
        %1316 = vmatprep.mubr.bf16.mxu0 0
        %1317 = vmatmul.mubr.bf16.gmra.mrb[0].mxu0 %v717
        %v1318 = vpop.f32.mrb[0].mxu0
        %v1319 = vadd.f32 0.0, %v1318
        %v1320 = vpop.f32.mrb[0].mxu0
        %v1321 = vpop.f32.mrb[0].mxu0
        %v1322 = vadd.f32 0.0, %v1321
        %v1323 = vpop.f32.mrb[0].mxu0
        %1324 = vmatprep.mubr.bf16.mxu0 0
        %1325 = vmatmul.mubr.bf16.gmra.mrb[0].mxu0 %v720
        %v1326 = vpop.f32.mrb[0].mxu0
        %v1327 = vadd.f32 0.0, %v1326
        %v1328 = vpop.f32.mrb[0].mxu0
        %v1329 = vpop.f32.mrb[0].mxu0
        %v1330 = vpop.f32.mrb[0].mxu0
        %1331 = vmatprep.mubr.bf16.mxu0 0
        %1332 = vmatmul.mubr.bf16.gmra.mrb[0].mxu0 %v723
        %v1333 = vpop.f32.mrb[0].mxu0
        %v1334 = vadd.f32 0.0, %v1333
        %v1335 = vpop.f32.mrb[0].mxu0
        %v1336 = vpop.f32.mrb[0].mxu0
        %v1337 = vadd.f32 0.0, %v1336
        %v1338 = vpop.f32.mrb[0].mxu0
        %1339 = vmatprep.mubr.bf16.mxu0 0
        %1340 = vmatmul.mubr.bf16.gmra.mrb[0].mxu0 %v726
        %v1341 = vpop.f32.mrb[0].mxu0
        %v1342 = vadd.f32 0.0, %v1341
        %v1343 = vpop.f32.mrb[0].mxu0
        %v1344 = vpop.f32.mrb[0].mxu0
        %v1345 = vpop.f32.mrb[0].mxu0
        %1346 = vmatprep.mubr.bf16.mxu0 0
        %1347 = vmatmul.mubr.bf16.gmra.mrb[0].mxu0 %v729
        %v1348 = vpop.f32.mrb[0].mxu0
        %v1349 = vadd.f32 0.0, %v1348
        %v1350 = vpop.f32.mrb[0].mxu0
        %v1351 = vpop.f32.mrb[0].mxu0
        %v1352 = vadd.f32 0.0, %v1351
        %v1353 = vpop.f32.mrb[0].mxu0
        %1354 = vmatprep.mubr.bf16.mxu0 0
        %1355 = vmatmul.mubr.bf16.gmra.mrb[0].mxu0 %v732
        %v1356 = vpop.f32.mrb[0].mxu0
        %v1357 = vadd.f32 0.0, %v1356
        %v1358 = vpop.f32.mrb[0].mxu0
        %v1359 = vpop.f32.mrb[0].mxu0
        %v1360 = vpop.f32.mrb[0].mxu0
        %1361 = vmatprep.mubr.bf16.mxu0 0
        %1362 = vmatmul.mubr.bf16.gmra.mrb[0].mxu0 %v735
        %v1363 = vpop.f32.mrb[0].mxu0
        %v1364 = vadd.f32 0.0, %v1363
        %v1365 = vpop.f32.mrb[0].mxu0
        %v1366 = vpop.f32.mrb[0].mxu0
        %v1367 = vadd.f32 0.0, %v1366
        %v1368 = vpop.f32.mrb[0].mxu0
        %1369 = vmatprep.mubr.bf16.mxu0 0
        %1370 = vmatmul.mubr.bf16.gmra.mrb[0].mxu0 %v738
        %v1371 = vpop.f32.mrb[0].mxu0
        %v1372 = vadd.f32 0.0, %v1371
        %v1373 = vpop.f32.mrb[0].mxu0
        %v1374 = vpop.f32.mrb[0].mxu0
        %v1375 = vpop.f32.mrb[0].mxu0
        %1376 = vmatprep.mubr.bf16.mxu0 0
        %1377 = vmatmul.mubr.bf16.gmra.mrb[0].mxu0 %v741
        %v1378 = vpop.f32.mrb[0].mxu0
        %v1379 = vadd.f32 0.0, %v1378
        %v1380 = vpop.f32.mrb[0].mxu0
        %v1381 = vpop.f32.mrb[0].mxu0
        %v1382 = vadd.f32 0.0, %v1381
        %v1383 = vpop.f32.mrb[0].mxu0
        %1384 = vmatprep.mubr.bf16.mxu0 0
        %1385 = vmatmul.mubr.bf16.gmra.mrb[0].mxu0 %v744
        %v1386 = vpop.f32.mrb[0].mxu0
        %v1387 = vadd.f32 0.0, %v1386
        %v1388 = vpop.f32.mrb[0].mxu0
        %v1389 = vpop.f32.mrb[0].mxu0
        %v1390 = vpop.f32.mrb[0].mxu0
        %1391 = vmatprep.mubr.bf16.mxu0 0
        %1392 = vmatmul.mubr.bf16.gmra.mrb[0].mxu0 %v747
        %v1393 = vpop.f32.mrb[0].mxu0
        %v1394 = vadd.f32 0.0, %v1393
        %v1395 = vpop.f32.mrb[0].mxu0
        %v1396 = vpop.f32.mrb[0].mxu0
        %v1397 = vadd.f32 0.0, %v1396
        %v1398 = vpop.f32.mrb[0].mxu0
        %1399 = vmatprep.mubr.bf16.mxu0 0
        %1400 = vmatmul.mubr.bf16.gmra.mrb[0].mxu0 %v750
        %v1401 = vpop.f32.mrb[0].mxu0
        %v1402 = vadd.f32 0.0, %v1401
        %v1403 = vpop.f32.mrb[0].mxu0
        %v1404 = vpop.f32.mrb[0].mxu0
        %v1405 = vpop.f32.mrb[0].mxu0
        %1406 = vdwg.mxu0
        %vm1431 = vcmask 1046528
        %v1432 = vrot.slane %v1289, 1
        %v1433 = vrot.slane %v1292, 1
        %v1434 = vsel %vm1431, %v1432, %v1433
        %v1435 = vrot.slane %v1297, 1
        %v1436 = vsel %vm1431, %v1433, %v1435
        %v1437 = vrot.slane %v1304, 1
        %v1438 = vrot.slane %v1307, 1
        %v1439 = vsel %vm1431, %v1437, %v1438
        %v1440 = vrot.slane %v1312, 1
        %v1441 = vsel %vm1431, %v1438, %v1440
        %v1442 = vrot.slane %v1319, 1
        %v1443 = vrot.slane %v1322, 1
        %v1444 = vsel %vm1431, %v1442, %v1443
        %v1445 = vrot.slane %v1327, 1
        %v1446 = vsel %vm1431, %v1443, %v1445
        %v1447 = vrot.slane %v1334, 1
        %v1448 = vrot.slane %v1337, 1
        %v1449 = vsel %vm1431, %v1447, %v1448
        %v1450 = vrot.slane %v1342, 1
        %v1451 = vsel %vm1431, %v1448, %v1450
        %v1452 = vrot.slane %v1349, 1
        %v1453 = vrot.slane %v1352, 1
        %v1454 = vsel %vm1431, %v1452, %v1453
        %v1455 = vrot.slane %v1357, 1
        %v1456 = vsel %vm1431, %v1453, %v1455
        %v1457 = vrot.slane %v1364, 1
        %v1458 = vrot.slane %v1367, 1
        %v1459 = vsel %vm1431, %v1457, %v1458
        %v1460 = vrot.slane %v1372, 1
        %v1461 = vsel %vm1431, %v1458, %v1460
        %v1462 = vrot.slane %v1379, 1
        %v1463 = vrot.slane %v1382, 1
        %v1464 = vsel %vm1431, %v1462, %v1463
        %v1465 = vrot.slane %v1387, 1
        %v1466 = vsel %vm1431, %v1463, %v1465
        %v1467 = vrot.slane %v1394, 1
        %v1468 = vrot.slane %v1397, 1
        %v1469 = vsel %vm1431, %v1467, %v1468
        %v1470 = vrot.slane %v1402, 1
        %v1471 = vsel %vm1431, %v1468, %v1470
        %v1488 = vadd.f32 %v1206, %v1434
        %v1489 = vadd.f32 %v1207, %v1436
        %v1490 = vadd.f32 %v1208, %v1439
        %v1491 = vadd.f32 %v1209, %v1441
        %v1492 = vadd.f32 %v1210, %v1444
        %v1493 = vadd.f32 %v1211, %v1446
        %v1494 = vadd.f32 %v1212, %v1449
        %v1495 = vadd.f32 %v1213, %v1451
        %v1496 = vadd.f32 %v1214, %v1454
        %v1497 = vadd.f32 %v1215, %v1456
        %v1498 = vadd.f32 %v1216, %v1459
        %v1499 = vadd.f32 %v1217, %v1461
        %v1500 = vadd.f32 %v1218, %v1464
        %v1501 = vadd.f32 %v1219, %v1466
        %v1502 = vadd.f32 %v1220, %v1469
        %v1503 = vadd.f32 %v1221, %v1471
        %1504 = vmatprep.subr.bf16.mxu0 0
        %1505 = vmatpush1.bf16.msra.mxu0 %v696
        %1506 = vmatprep.subr.bf16.mxu0 0
        %1507 = vmatpush1.bf16.msra.mxu0 %v697
        %1508 = vmatprep.subr.bf16.mxu0 0
        %1509 = vmatpush1.bf16.msra.mxu0 %v698
        %1510 = vmatprep.subr.bf16.mxu0 0
        %1511 = vmatpush1.bf16.msra.mxu0 %v754
        %1512 = vmatprep.subr.bf16.mxu0 0
        %1513 = vmatpush1.bf16.msra.mxu0 0
        %1514 = vmatprep.subr.bf16.mxu0 0
        %1515 = vmatpush1.bf16.msra.mxu0 0
        %1516 = vmatprep.subr.bf16.mxu0 0
        %1517 = vmatpush1.bf16.msra.mxu0 0
        %1518 = vmatprep.subr.bf16.mxu0 0
        %1519 = vmatpush1.bf16.msra.mxu0 0
        %1520 = vmatprep.subr.bf16.mxu0 0
        %1521 = vmatpush1.bf16.msra.mxu0 0
        %1522 = vmatprep.subr.bf16.mxu0 0
        %1523 = vmatpush1.bf16.msra.mxu0 0
        %1524 = vmatprep.subr.bf16.mxu0 0
        %1525 = vmatpush1.bf16.msra.mxu0 0
        %1526 = vmatprep.subr.bf16.mxu0 0
        %1527 = vmatpush1.bf16.msra.mxu0 0
        %1528 = vmatprep.subr.bf16.mxu0 0
        %1529 = vmatpush1.bf16.msra.mxu0 0
        %1530 = vmatprep.subr.bf16.mxu0 0
        %1531 = vmatpush1.bf16.msra.mxu0 0
        %1532 = vmatprep.subr.bf16.mxu0 0
        %1533 = vmatpush1.bf16.msra.mxu0 0
        %1534 = vmatprep.subr.bf16.mxu0 0
        %1535 = vmatpush1.bf16.msra.mxu0 0
        %1536 = vmatprep.mubr.bf16.mxu0 0
        %1537 = vmatmul.mubr.bf16.gmra.mrb[0].mxu0 %v1011
        %v1538 = vpop.f32.mrb[0].mxu0
        %v1539 = vadd.f32 0.0, %v1538
        %v1540 = vpop.f32.mrb[0].mxu0
        %v1541 = vpop.f32.mrb[0].mxu0
        %v1542 = vadd.f32 0.0, %v1541
        %v1543 = vpop.f32.mrb[0].mxu0
        %1544 = vmatprep.mubr.bf16.mxu0 0
        %1545 = vmatmul.mubr.bf16.gmra.mrb[0].mxu0 %v1014
        %v1546 = vpop.f32.mrb[0].mxu0
        %v1547 = vpop.f32.mrb[0].mxu0
        %v1548 = vpop.f32.mrb[0].mxu0
        %v1549 = vpop.f32.mrb[0].mxu0
        %1550 = vmatprep.mubr.bf16.mxu0 0
        %1551 = vmatmul.mubr.bf16.gmra.mrb[0].mxu0 %v1017
        %v1552 = vpop.f32.mrb[0].mxu0
        %v1553 = vadd.f32 0.0, %v1552
        %v1554 = vpop.f32.mrb[0].mxu0
        %v1555 = vpop.f32.mrb[0].mxu0
        %v1556 = vadd.f32 0.0, %v1555
        %v1557 = vpop.f32.mrb[0].mxu0
        %1558 = vmatprep.mubr.bf16.mxu0 0
        %1559 = vmatmul.mubr.bf16.gmra.mrb[0].mxu0 %v1020
        %v1560 = vpop.f32.mrb[0].mxu0
        %v1561 = vpop.f32.mrb[0].mxu0
        %v1562 = vpop.f32.mrb[0].mxu0
        %v1563 = vpop.f32.mrb[0].mxu0
        %1564 = vmatprep.mubr.bf16.mxu0 0
        %1565 = vmatmul.mubr.bf16.gmra.mrb[0].mxu0 %v1023
        %v1566 = vpop.f32.mrb[0].mxu0
        %v1567 = vadd.f32 0.0, %v1566
        %v1568 = vpop.f32.mrb[0].mxu0
        %v1569 = vpop.f32.mrb[0].mxu0
        %v1570 = vadd.f32 0.0, %v1569
        %v1571 = vpop.f32.mrb[0].mxu0
        %1572 = vmatprep.mubr.bf16.mxu0 0
        %1573 = vmatmul.mubr.bf16.gmra.mrb[0].mxu0 %v1026
        %v1574 = vpop.f32.mrb[0].mxu0
        %v1575 = vpop.f32.mrb[0].mxu0
        %v1576 = vpop.f32.mrb[0].mxu0
        %v1577 = vpop.f32.mrb[0].mxu0
        %1578 = vmatprep.mubr.bf16.mxu0 0
        %1579 = vmatmul.mubr.bf16.gmra.mrb[0].mxu0 %v1029
        %v1580 = vpop.f32.mrb[0].mxu0
        %v1581 = vadd.f32 0.0, %v1580
        %v1582 = vpop.f32.mrb[0].mxu0
        %v1583 = vpop.f32.mrb[0].mxu0
        %v1584 = vadd.f32 0.0, %v1583
        %v1585 = vpop.f32.mrb[0].mxu0
        %1586 = vmatprep.mubr.bf16.mxu0 0
        %1587 = vmatmul.mubr.bf16.gmra.mrb[0].mxu0 %v1032
        %v1588 = vpop.f32.mrb[0].mxu0
        %v1589 = vpop.f32.mrb[0].mxu0
        %v1590 = vpop.f32.mrb[0].mxu0
        %v1591 = vpop.f32.mrb[0].mxu0
        %1592 = vmatprep.mubr.bf16.mxu0 0
        %1593 = vmatmul.mubr.bf16.gmra.mrb[0].mxu0 %v1035
        %v1594 = vpop.f32.mrb[0].mxu0
        %v1595 = vadd.f32 0.0, %v1594
        %v1596 = vpop.f32.mrb[0].mxu0
        %v1597 = vpop.f32.mrb[0].mxu0
        %v1598 = vadd.f32 0.0, %v1597
        %v1599 = vpop.f32.mrb[0].mxu0
        %1600 = vmatprep.mubr.bf16.mxu0 0
        %1601 = vmatmul.mubr.bf16.gmra.mrb[0].mxu0 %v1038
        %v1602 = vpop.f32.mrb[0].mxu0
        %v1603 = vpop.f32.mrb[0].mxu0
        %v1604 = vpop.f32.mrb[0].mxu0
        %v1605 = vpop.f32.mrb[0].mxu0
        %1606 = vmatprep.mubr.bf16.mxu0 0
        %1607 = vmatmul.mubr.bf16.gmra.mrb[0].mxu0 %v1041
        %v1608 = vpop.f32.mrb[0].mxu0
        %v1609 = vadd.f32 0.0, %v1608
        %v1610 = vpop.f32.mrb[0].mxu0
        %v1611 = vpop.f32.mrb[0].mxu0
        %v1612 = vadd.f32 0.0, %v1611
        %v1613 = vpop.f32.mrb[0].mxu0
        %1614 = vmatprep.mubr.bf16.mxu0 0
        %1615 = vmatmul.mubr.bf16.gmra.mrb[0].mxu0 %v1044
        %v1616 = vpop.f32.mrb[0].mxu0
        %v1617 = vpop.f32.mrb[0].mxu0
        %v1618 = vpop.f32.mrb[0].mxu0
        %v1619 = vpop.f32.mrb[0].mxu0
        %1620 = vmatprep.mubr.bf16.mxu0 0
        %1621 = vmatmul.mubr.bf16.gmra.mrb[0].mxu0 %v1047
        %v1622 = vpop.f32.mrb[0].mxu0
        %v1623 = vadd.f32 0.0, %v1622
        %v1624 = vpop.f32.mrb[0].mxu0
        %v1625 = vpop.f32.mrb[0].mxu0
        %v1626 = vadd.f32 0.0, %v1625
        %v1627 = vpop.f32.mrb[0].mxu0
        %1628 = vmatprep.mubr.bf16.mxu0 0
        %1629 = vmatmul.mubr.bf16.gmra.mrb[0].mxu0 %v1050
        %v1630 = vpop.f32.mrb[0].mxu0
        %v1631 = vpop.f32.mrb[0].mxu0
        %v1632 = vpop.f32.mrb[0].mxu0
        %v1633 = vpop.f32.mrb[0].mxu0
        %1634 = vmatprep.mubr.bf16.mxu0 0
        %1635 = vmatmul.mubr.bf16.gmra.mrb[0].mxu0 %v1053
        %v1636 = vpop.f32.mrb[0].mxu0
        %v1637 = vadd.f32 0.0, %v1636
        %v1638 = vpop.f32.mrb[0].mxu0
        %v1639 = vpop.f32.mrb[0].mxu0
        %v1640 = vadd.f32 0.0, %v1639
        %v1641 = vpop.f32.mrb[0].mxu0
        %1642 = vmatprep.mubr.bf16.mxu0 0
        %1643 = vmatmul.mubr.bf16.gmra.mrb[0].mxu0 %v1056
        %v1644 = vpop.f32.mrb[0].mxu0
        %v1645 = vpop.f32.mrb[0].mxu0
        %v1646 = vpop.f32.mrb[0].mxu0
        %v1647 = vpop.f32.mrb[0].mxu0
        %1648 = vdwg.mxu0
        %1649 = vmatprep.subr.bf16.mxu0 0
        %1650 = vmatpush1.bf16.msra.mxu0 %v1003
        %1651 = vmatprep.subr.bf16.mxu0 0
        %1652 = vmatpush1.bf16.msra.mxu0 %v1004
        %1653 = vmatprep.subr.bf16.mxu0 0
        %1654 = vmatpush1.bf16.msra.mxu0 %v1005
        %1655 = vmatprep.subr.bf16.mxu0 0
        %1656 = vmatpush1.bf16.msra.mxu0 %v1059
        %1657 = vmatprep.subr.bf16.mxu0 0
        %1658 = vmatpush1.bf16.msra.mxu0 0
        %1659 = vmatprep.subr.bf16.mxu0 0
        %1660 = vmatpush1.bf16.msra.mxu0 0
        %1661 = vmatprep.subr.bf16.mxu0 0
        %1662 = vmatpush1.bf16.msra.mxu0 0
        %1663 = vmatprep.subr.bf16.mxu0 0
        %1664 = vmatpush1.bf16.msra.mxu0 0
        %1665 = vmatprep.subr.bf16.mxu0 0
        %1666 = vmatpush1.bf16.msra.mxu0 0
        %1667 = vmatprep.subr.bf16.mxu0 0
        %1668 = vmatpush1.bf16.msra.mxu0 0
        %1669 = vmatprep.subr.bf16.mxu0 0
        %1670 = vmatpush1.bf16.msra.mxu0 0
        %1671 = vmatprep.subr.bf16.mxu0 0
        %1672 = vmatpush1.bf16.msra.mxu0 0
        %1673 = vmatprep.subr.bf16.mxu0 0
        %1674 = vmatpush1.bf16.msra.mxu0 0
        %1675 = vmatprep.subr.bf16.mxu0 0
        %1676 = vmatpush1.bf16.msra.mxu0 0
        %1677 = vmatprep.subr.bf16.mxu0 0
        %1678 = vmatpush1.bf16.msra.mxu0 0
        %1679 = vmatprep.subr.bf16.mxu0 0
        %1680 = vmatpush1.bf16.msra.mxu0 0
        %1681 = vmatprep.mubr.bf16.mxu0 0
        %1682 = vmatmul.mubr.bf16.gmra.mrb[0].mxu0 %v705
        %v1683 = vpop.f32.mrb[0].mxu0
        %v1684 = vadd.f32 0.0, %v1683
        %v1685 = vpop.f32.mrb[0].mxu0
        %v1686 = vpop.f32.mrb[0].mxu0
        %v1687 = vadd.f32 0.0, %v1686
        %v1688 = vpop.f32.mrb[0].mxu0
        %1689 = vmatprep.mubr.bf16.mxu0 0
        %1690 = vmatmul.mubr.bf16.gmra.mrb[0].mxu0 %v708
        %v1691 = vpop.f32.mrb[0].mxu0
        %v1692 = vadd.f32 0.0, %v1691
        %v1693 = vpop.f32.mrb[0].mxu0
        %v1694 = vpop.f32.mrb[0].mxu0
        %v1695 = vpop.f32.mrb[0].mxu0
        %1696 = vmatprep.mubr.bf16.mxu0 0
        %1697 = vmatmul.mubr.bf16.gmra.mrb[0].mxu0 %v711
        %v1698 = vpop.f32.mrb[0].mxu0
        %v1699 = vadd.f32 0.0, %v1698
        %v1700 = vpop.f32.mrb[0].mxu0
        %v1701 = vpop.f32.mrb[0].mxu0
        %v1702 = vadd.f32 0.0, %v1701
        %v1703 = vpop.f32.mrb[0].mxu0
        %1704 = vmatprep.mubr.bf16.mxu0 0
        %1705 = vmatmul.mubr.bf16.gmra.mrb[0].mxu0 %v714
        %v1706 = vpop.f32.mrb[0].mxu0
        %v1707 = vadd.f32 0.0, %v1706
        %v1708 = vpop.f32.mrb[0].mxu0
        %v1709 = vpop.f32.mrb[0].mxu0
        %v1710 = vpop.f32.mrb[0].mxu0
        %1711 = vmatprep.mubr.bf16.mxu0 0
        %1712 = vmatmul.mubr.bf16.gmra.mrb[0].mxu0 %v717
        %v1713 = vpop.f32.mrb[0].mxu0
        %v1714 = vadd.f32 0.0, %v1713
        %v1715 = vpop.f32.mrb[0].mxu0
        %v1716 = vpop.f32.mrb[0].mxu0
        %v1717 = vadd.f32 0.0, %v1716
        %v1718 = vpop.f32.mrb[0].mxu0
        %1719 = vmatprep.mubr.bf16.mxu0 0
        %1720 = vmatmul.mubr.bf16.gmra.mrb[0].mxu0 %v720
        %v1721 = vpop.f32.mrb[0].mxu0
        %v1722 = vadd.f32 0.0, %v1721
        %v1723 = vpop.f32.mrb[0].mxu0
        %v1724 = vpop.f32.mrb[0].mxu0
        %v1725 = vpop.f32.mrb[0].mxu0
        %1726 = vmatprep.mubr.bf16.mxu0 0
        %1727 = vmatmul.mubr.bf16.gmra.mrb[0].mxu0 %v723
        %v1728 = vpop.f32.mrb[0].mxu0
        %v1729 = vadd.f32 0.0, %v1728
        %v1730 = vpop.f32.mrb[0].mxu0
        %v1731 = vpop.f32.mrb[0].mxu0
        %v1732 = vadd.f32 0.0, %v1731
        %v1733 = vpop.f32.mrb[0].mxu0
        %1734 = vmatprep.mubr.bf16.mxu0 0
        %1735 = vmatmul.mubr.bf16.gmra.mrb[0].mxu0 %v726
        %v1736 = vpop.f32.mrb[0].mxu0
        %v1737 = vadd.f32 0.0, %v1736
        %v1738 = vpop.f32.mrb[0].mxu0
        %v1739 = vpop.f32.mrb[0].mxu0
        %v1740 = vpop.f32.mrb[0].mxu0
        %1741 = vmatprep.mubr.bf16.mxu0 0
        %1742 = vmatmul.mubr.bf16.gmra.mrb[0].mxu0 %v729
        %v1743 = vpop.f32.mrb[0].mxu0
        %v1744 = vadd.f32 0.0, %v1743
        %v1745 = vpop.f32.mrb[0].mxu0
        %v1746 = vpop.f32.mrb[0].mxu0
        %v1747 = vadd.f32 0.0, %v1746
        %v1748 = vpop.f32.mrb[0].mxu0
        %1749 = vmatprep.mubr.bf16.mxu0 0
        %1750 = vmatmul.mubr.bf16.gmra.mrb[0].mxu0 %v732
        %v1751 = vpop.f32.mrb[0].mxu0
        %v1752 = vadd.f32 0.0, %v1751
        %v1753 = vpop.f32.mrb[0].mxu0
        %v1754 = vpop.f32.mrb[0].mxu0
        %v1755 = vpop.f32.mrb[0].mxu0
        %1756 = vmatprep.mubr.bf16.mxu0 0
        %1757 = vmatmul.mubr.bf16.gmra.mrb[0].mxu0 %v735
        %v1758 = vpop.f32.mrb[0].mxu0
        %v1759 = vadd.f32 0.0, %v1758
        %v1760 = vpop.f32.mrb[0].mxu0
        %v1761 = vpop.f32.mrb[0].mxu0
        %v1762 = vadd.f32 0.0, %v1761
        %v1763 = vpop.f32.mrb[0].mxu0
        %1764 = vmatprep.mubr.bf16.mxu0 0
        %1765 = vmatmul.mubr.bf16.gmra.mrb[0].mxu0 %v738
        %v1766 = vpop.f32.mrb[0].mxu0
        %v1767 = vadd.f32 0.0, %v1766
        %v1768 = vpop.f32.mrb[0].mxu0
        %v1769 = vpop.f32.mrb[0].mxu0
        %v1770 = vpop.f32.mrb[0].mxu0
        %1771 = vmatprep.mubr.bf16.mxu0 0
        %1772 = vmatmul.mubr.bf16.gmra.mrb[0].mxu0 %v741
        %v1773 = vpop.f32.mrb[0].mxu0
        %v1774 = vadd.f32 0.0, %v1773
        %v1775 = vpop.f32.mrb[0].mxu0
        %v1776 = vpop.f32.mrb[0].mxu0
        %v1777 = vadd.f32 0.0, %v1776
        %v1778 = vpop.f32.mrb[0].mxu0
        %1779 = vmatprep.mubr.bf16.mxu0 0
        %1780 = vmatmul.mubr.bf16.gmra.mrb[0].mxu0 %v744
        %v1781 = vpop.f32.mrb[0].mxu0
        %v1782 = vadd.f32 0.0, %v1781
        %v1783 = vpop.f32.mrb[0].mxu0
        %v1784 = vpop.f32.mrb[0].mxu0
        %v1785 = vpop.f32.mrb[0].mxu0
        %1786 = vmatprep.mubr.bf16.mxu0 0
        %1787 = vmatmul.mubr.bf16.gmra.mrb[0].mxu0 %v747
        %v1788 = vpop.f32.mrb[0].mxu0
        %v1789 = vadd.f32 0.0, %v1788
        %v1790 = vpop.f32.mrb[0].mxu0
        %v1791 = vpop.f32.mrb[0].mxu0
        %v1792 = vadd.f32 0.0, %v1791
        %v1793 = vpop.f32.mrb[0].mxu0
        %1794 = vmatprep.mubr.bf16.mxu0 0
        %1795 = vmatmul.mubr.bf16.gmra.mrb[0].mxu0 %v750
        %v1796 = vpop.f32.mrb[0].mxu0
        %v1797 = vadd.f32 0.0, %v1796
        %v1798 = vpop.f32.mrb[0].mxu0
        %v1799 = vpop.f32.mrb[0].mxu0
        %v1800 = vpop.f32.mrb[0].mxu0
        %1801 = vdwg.mxu0
        %v1826 = vrot.slane %v1684, 1
        %v1827 = vrot.slane %v1687, 1
        %v1828 = vsel %vm1431, %v1826, %v1827
        %v1829 = vrot.slane %v1692, 1
        %v1830 = vsel %vm1431, %v1827, %v1829
        %v1831 = vrot.slane %v1699, 1
        %v1832 = vrot.slane %v1702, 1
        %v1833 = vsel %vm1431, %v1831, %v1832
        %v1834 = vrot.slane %v1707, 1
        %v1835 = vsel %vm1431, %v1832, %v1834
        %v1836 = vrot.slane %v1714, 1
        %v1837 = vrot.slane %v1717, 1
        %v1838 = vsel %vm1431, %v1836, %v1837
        %v1839 = vrot.slane %v1722, 1
        %v1840 = vsel %vm1431, %v1837, %v1839
        %v1841 = vrot.slane %v1729, 1
        %v1842 = vrot.slane %v1732, 1
        %v1843 = vsel %vm1431, %v1841, %v1842
        %v1844 = vrot.slane %v1737, 1
        %v1845 = vsel %vm1431, %v1842, %v1844
        %v1846 = vrot.slane %v1744, 1
        %v1847 = vrot.slane %v1747, 1
        %v1848 = vsel %vm1431, %v1846, %v1847
        %v1849 = vrot.slane %v1752, 1
        %v1850 = vsel %vm1431, %v1847, %v1849
        %v1851 = vrot.slane %v1759, 1
        %v1852 = vrot.slane %v1762, 1
        %v1853 = vsel %vm1431, %v1851, %v1852
        %v1854 = vrot.slane %v1767, 1
        %v1855 = vsel %vm1431, %v1852, %v1854
        %v1856 = vrot.slane %v1774, 1
        %v1857 = vrot.slane %v1777, 1
        %v1858 = vsel %vm1431, %v1856, %v1857
        %v1859 = vrot.slane %v1782, 1
        %v1860 = vsel %vm1431, %v1857, %v1859
        %v1861 = vrot.slane %v1789, 1
        %v1862 = vrot.slane %v1792, 1
        %v1863 = vsel %vm1431, %v1861, %v1862
        %v1864 = vrot.slane %v1797, 1
        %v1865 = vsel %vm1431, %v1862, %v1864
        %v1882 = vadd.f32 %v1539, %v1828
        %v1883 = vadd.f32 %v1542, %v1830
        %v1884 = vadd.f32 %v1553, %v1833
        %v1885 = vadd.f32 %v1556, %v1835
        %v1886 = vadd.f32 %v1567, %v1838
        %v1887 = vadd.f32 %v1570, %v1840
        %v1888 = vadd.f32 %v1581, %v1843
        %v1889 = vadd.f32 %v1584, %v1845
        %v1890 = vadd.f32 %v1595, %v1848
        %v1891 = vadd.f32 %v1598, %v1850
        %v1892 = vadd.f32 %v1609, %v1853
        %v1893 = vadd.f32 %v1612, %v1855
        %v1894 = vadd.f32 %v1623, %v1858
        %v1895 = vadd.f32 %v1626, %v1860
        %v1896 = vadd.f32 %v1637, %v1863
        %v1897 = vadd.f32 %v1640, %v1865
        %1898 = vmatprep.subr.bf16.mxu0 0
        %1899 = vmatpush1.bf16.msra.mxu0 %v1244
        %1900 = vmatprep.subr.bf16.mxu0 0
        %1901 = vmatpush1.bf16.msra.mxu0 %v1245
        %1902 = vmatprep.subr.bf16.mxu0 0
        %1903 = vmatpush1.bf16.msra.mxu0 %v1246
        %1904 = vmatprep.subr.bf16.mxu0 0
        %1905 = vmatpush1.bf16.msra.mxu0 %v1252
        %1906 = vmatprep.subr.bf16.mxu0 0
        %1907 = vmatpush1.bf16.msra.mxu0 0
        %1908 = vmatprep.subr.bf16.mxu0 0
        %1909 = vmatpush1.bf16.msra.mxu0 0
        %1910 = vmatprep.subr.bf16.mxu0 0
        %1911 = vmatpush1.bf16.msra.mxu0 0
        %1912 = vmatprep.subr.bf16.mxu0 0
        %1913 = vmatpush1.bf16.msra.mxu0 0
        %1914 = vmatprep.subr.bf16.mxu0 0
        %1915 = vmatpush1.bf16.msra.mxu0 0
        %1916 = vmatprep.subr.bf16.mxu0 0
        %1917 = vmatpush1.bf16.msra.mxu0 0
        %1918 = vmatprep.subr.bf16.mxu0 0
        %1919 = vmatpush1.bf16.msra.mxu0 0
        %1920 = vmatprep.subr.bf16.mxu0 0
        %1921 = vmatpush1.bf16.msra.mxu0 0
        %1922 = vmatprep.subr.bf16.mxu0 0
        %1923 = vmatpush1.bf16.msra.mxu0 0
        %1924 = vmatprep.subr.bf16.mxu0 0
        %1925 = vmatpush1.bf16.msra.mxu0 0
        %1926 = vmatprep.subr.bf16.mxu0 0
        %1927 = vmatpush1.bf16.msra.mxu0 0
        %1928 = vmatprep.subr.bf16.mxu0 0
        %1929 = vmatpush1.bf16.msra.mxu0 0
        %1930 = vmatprep.mubr.bf16.mxu0 0
        %1931 = vmatmul.mubr.bf16.gmra.mrb[0].mxu0 %v1011
        %v1932 = vpop.f32.mrb[0].mxu0
        %v1933 = vadd.f32 0.0, %v1932
        %v1934 = vpop.f32.mrb[0].mxu0
        %v1935 = vpop.f32.mrb[0].mxu0
        %v1936 = vadd.f32 0.0, %v1935
        %v1937 = vpop.f32.mrb[0].mxu0
        %1938 = vmatprep.mubr.bf16.mxu0 0
        %1939 = vmatmul.mubr.bf16.gmra.mrb[0].mxu0 %v1014
        %v1940 = vpop.f32.mrb[0].mxu0
        %v1941 = vadd.f32 0.0, %v1940
        %v1942 = vpop.f32.mrb[0].mxu0
        %v1943 = vpop.f32.mrb[0].mxu0
        %v1944 = vpop.f32.mrb[0].mxu0
        %1945 = vmatprep.mubr.bf16.mxu0 0
        %1946 = vmatmul.mubr.bf16.gmra.mrb[0].mxu0 %v1017
        %v1947 = vpop.f32.mrb[0].mxu0
        %v1948 = vadd.f32 0.0, %v1947
        %v1949 = vpop.f32.mrb[0].mxu0
        %v1950 = vpop.f32.mrb[0].mxu0
        %v1951 = vadd.f32 0.0, %v1950
        %v1952 = vpop.f32.mrb[0].mxu0
        %1953 = vmatprep.mubr.bf16.mxu0 0
        %1954 = vmatmul.mubr.bf16.gmra.mrb[0].mxu0 %v1020
        %v1955 = vpop.f32.mrb[0].mxu0
        %v1956 = vadd.f32 0.0, %v1955
        %v1957 = vpop.f32.mrb[0].mxu0
        %v1958 = vpop.f32.mrb[0].mxu0
        %v1959 = vpop.f32.mrb[0].mxu0
        %1960 = vmatprep.mubr.bf16.mxu0 0
        %1961 = vmatmul.mubr.bf16.gmra.mrb[0].mxu0 %v1023
        %v1962 = vpop.f32.mrb[0].mxu0
        %v1963 = vadd.f32 0.0, %v1962
        %v1964 = vpop.f32.mrb[0].mxu0
        %v1965 = vpop.f32.mrb[0].mxu0
        %v1966 = vadd.f32 0.0, %v1965
        %v1967 = vpop.f32.mrb[0].mxu0
        %1968 = vmatprep.mubr.bf16.mxu0 0
        %1969 = vmatmul.mubr.bf16.gmra.mrb[0].mxu0 %v1026
        %v1970 = vpop.f32.mrb[0].mxu0
        %v1971 = vadd.f32 0.0, %v1970
        %v1972 = vpop.f32.mrb[0].mxu0
        %v1973 = vpop.f32.mrb[0].mxu0
        %v1974 = vpop.f32.mrb[0].mxu0
        %1975 = vmatprep.mubr.bf16.mxu0 0
        %1976 = vmatmul.mubr.bf16.gmra.mrb[0].mxu0 %v1029
        %v1977 = vpop.f32.mrb[0].mxu0
        %v1978 = vadd.f32 0.0, %v1977
        %v1979 = vpop.f32.mrb[0].mxu0
        %v1980 = vpop.f32.mrb[0].mxu0
        %v1981 = vadd.f32 0.0, %v1980
        %v1982 = vpop.f32.mrb[0].mxu0
        %1983 = vmatprep.mubr.bf16.mxu0 0
        %1984 = vmatmul.mubr.bf16.gmra.mrb[0].mxu0 %v1032
        %v1985 = vpop.f32.mrb[0].mxu0
        %v1986 = vadd.f32 0.0, %v1985
        %v1987 = vpop.f32.mrb[0].mxu0
        %v1988 = vpop.f32.mrb[0].mxu0
        %v1989 = vpop.f32.mrb[0].mxu0
        %1990 = vmatprep.mubr.bf16.mxu0 0
        %1991 = vmatmul.mubr.bf16.gmra.mrb[0].mxu0 %v1035
        %v1992 = vpop.f32.mrb[0].mxu0
        %v1993 = vadd.f32 0.0, %v1992
        %v1994 = vpop.f32.mrb[0].mxu0
        %v1995 = vpop.f32.mrb[0].mxu0
        %v1996 = vadd.f32 0.0, %v1995
        %v1997 = vpop.f32.mrb[0].mxu0
        %1998 = vmatprep.mubr.bf16.mxu0 0
        %1999 = vmatmul.mubr.bf16.gmra.mrb[0].mxu0 %v1038
        %v2000 = vpop.f32.mrb[0].mxu0
        %v2001 = vadd.f32 0.0, %v2000
        %v2002 = vpop.f32.mrb[0].mxu0
        %v2003 = vpop.f32.mrb[0].mxu0
        %v2004 = vpop.f32.mrb[0].mxu0
        %2005 = vmatprep.mubr.bf16.mxu0 0
        %2006 = vmatmul.mubr.bf16.gmra.mrb[0].mxu0 %v1041
        %v2007 = vpop.f32.mrb[0].mxu0
        %v2008 = vadd.f32 0.0, %v2007
        %v2009 = vpop.f32.mrb[0].mxu0
        %v2010 = vpop.f32.mrb[0].mxu0
        %v2011 = vadd.f32 0.0, %v2010
        %v2012 = vpop.f32.mrb[0].mxu0
        %2013 = vmatprep.mubr.bf16.mxu0 0
        %2014 = vmatmul.mubr.bf16.gmra.mrb[0].mxu0 %v1044
        %v2015 = vpop.f32.mrb[0].mxu0
        %v2016 = vadd.f32 0.0, %v2015
        %v2017 = vpop.f32.mrb[0].mxu0
        %v2018 = vpop.f32.mrb[0].mxu0
        %v2019 = vpop.f32.mrb[0].mxu0
        %2020 = vmatprep.mubr.bf16.mxu0 0
        %2021 = vmatmul.mubr.bf16.gmra.mrb[0].mxu0 %v1047
        %v2022 = vpop.f32.mrb[0].mxu0
        %v2023 = vadd.f32 0.0, %v2022
        %v2024 = vpop.f32.mrb[0].mxu0
        %v2025 = vpop.f32.mrb[0].mxu0
        %v2026 = vadd.f32 0.0, %v2025
        %v2027 = vpop.f32.mrb[0].mxu0
        %2028 = vmatprep.mubr.bf16.mxu0 0
        %2029 = vmatmul.mubr.bf16.gmra.mrb[0].mxu0 %v1050
        %v2030 = vpop.f32.mrb[0].mxu0
        %v2031 = vadd.f32 0.0, %v2030
        %v2032 = vpop.f32.mrb[0].mxu0
        %v2033 = vpop.f32.mrb[0].mxu0
        %v2034 = vpop.f32.mrb[0].mxu0
        %2035 = vmatprep.mubr.bf16.mxu0 0
        %2036 = vmatmul.mubr.bf16.gmra.mrb[0].mxu0 %v1053
        %v2037 = vpop.f32.mrb[0].mxu0
        %v2038 = vadd.f32 0.0, %v2037
        %v2039 = vpop.f32.mrb[0].mxu0
        %v2040 = vpop.f32.mrb[0].mxu0
        %v2041 = vadd.f32 0.0, %v2040
        %v2042 = vpop.f32.mrb[0].mxu0
        %2043 = vmatprep.mubr.bf16.mxu0 0
        %2044 = vmatmul.mubr.bf16.gmra.mrb[0].mxu0 %v1056
        %v2045 = vpop.f32.mrb[0].mxu0
        %v2046 = vadd.f32 0.0, %v2045
        %v2047 = vpop.f32.mrb[0].mxu0
        %v2048 = vpop.f32.mrb[0].mxu0
        %v2049 = vpop.f32.mrb[0].mxu0
        %2050 = vdwg.mxu0
        %v2075 = vrot.slane %v1933, 1
        %v2076 = vrot.slane %v1936, 1
        %v2077 = vsel %vm1431, %v2075, %v2076
        %v2078 = vrot.slane %v1941, 1
        %v2079 = vsel %vm1431, %v2076, %v2078
        %v2080 = vrot.slane %v1948, 1
        %v2081 = vrot.slane %v1951, 1
        %v2082 = vsel %vm1431, %v2080, %v2081
        %v2083 = vrot.slane %v1956, 1
        %v2084 = vsel %vm1431, %v2081, %v2083
        %v2085 = vrot.slane %v1963, 1
        %v2086 = vrot.slane %v1966, 1
        %v2087 = vsel %vm1431, %v2085, %v2086
        %v2088 = vrot.slane %v1971, 1
        %v2089 = vsel %vm1431, %v2086, %v2088
        %v2090 = vrot.slane %v1978, 1
        %v2091 = vrot.slane %v1981, 1
        %v2092 = vsel %vm1431, %v2090, %v2091
        %v2093 = vrot.slane %v1986, 1
        %v2094 = vsel %vm1431, %v2091, %v2093
        %v2095 = vrot.slane %v1993, 1
        %v2096 = vrot.slane %v1996, 1
        %v2097 = vsel %vm1431, %v2095, %v2096
        %v2098 = vrot.slane %v2001, 1
        %v2099 = vsel %vm1431, %v2096, %v2098
        %v2100 = vrot.slane %v2008, 1
        %v2101 = vrot.slane %v2011, 1
        %v2102 = vsel %vm1431, %v2100, %v2101
        %v2103 = vrot.slane %v2016, 1
        %v2104 = vsel %vm1431, %v2101, %v2103
        %v2105 = vrot.slane %v2023, 1
        %v2106 = vrot.slane %v2026, 1
        %v2107 = vsel %vm1431, %v2105, %v2106
        %v2108 = vrot.slane %v2031, 1
        %v2109 = vsel %vm1431, %v2106, %v2108
        %v2110 = vrot.slane %v2038, 1
        %v2111 = vrot.slane %v2041, 1
        %v2112 = vsel %vm1431, %v2110, %v2111
        %v2113 = vrot.slane %v2046, 1
        %v2114 = vsel %vm1431, %v2111, %v2113
        %v2131 = vadd.f32 %v1882, %v2077
        %v2132 = vadd.f32 %v1883, %v2079
        %v2133 = vadd.f32 %v1884, %v2082
        %v2134 = vadd.f32 %v1885, %v2084
        %v2135 = vadd.f32 %v1886, %v2087
        %v2136 = vadd.f32 %v1887, %v2089
        %v2137 = vadd.f32 %v1888, %v2092
        %v2138 = vadd.f32 %v1889, %v2094
        %v2139 = vadd.f32 %v1890, %v2097
        %v2140 = vadd.f32 %v1891, %v2099
        %v2141 = vadd.f32 %v1892, %v2102
        %v2142 = vadd.f32 %v1893, %v2104
        %v2143 = vadd.f32 %v1894, %v2107
        %v2144 = vadd.f32 %v1895, %v2109
        %v2145 = vadd.f32 %v1896, %v2112
        %v2146 = vadd.f32 %v1897, %v2114
        %v2147 = vmax.f32 %v1488, %v2131
        %v2148 = vmax.f32 %v1489, %v2132
        %v2149 = vmax.f32 %v1490, %v2133
        %v2150 = vmax.f32 %v1491, %v2134
        %v2151 = vmax.f32 %v1492, %v2135
        %v2152 = vmax.f32 %v1493, %v2136
        %v2153 = vmax.f32 %v1494, %v2137
        %v2154 = vmax.f32 %v1495, %v2138
        %v2155 = vmax.f32 %v1496, %v2139
        %v2156 = vmax.f32 %v1497, %v2140
        %v2157 = vmax.f32 %v1498, %v2141
        %v2158 = vmax.f32 %v1499, %v2142
        %v2159 = vmax.f32 %v1500, %v2143
        %v2160 = vmax.f32 %v1501, %v2144
        %v2161 = vmax.f32 %v1502, %v2145
        %v2162 = vmax.f32 %v1503, %v2146
        %v2163 = vld [vmem:[#allocation8] sm:$0x1]
        %v2165 = vlaneseq
        %v2166 = vshrl.u32 %v2165, 7
        %v2167 = vsub.s32 0, %v2166
        %v2168 = vrot.slane %v2163, %v2167
        %v2170 = vadd.f32 %v2147, %v2168
        %v2171 = vadd.f32 %v2148, %v2168
        %v2172 = vadd.f32 %v2149, %v2168
        %v2173 = vadd.f32 %v2150, %v2168
        %v2174 = vadd.f32 %v2151, %v2168
        %v2175 = vadd.f32 %v2152, %v2168
        %v2176 = vadd.f32 %v2153, %v2168
        %v2177 = vadd.f32 %v2154, %v2168
        %v2178 = vadd.f32 %v2155, %v2168
        %v2179 = vadd.f32 %v2156, %v2168
        %v2180 = vadd.f32 %v2157, %v2168
        %v2181 = vadd.f32 %v2158, %v2168
        %v2182 = vadd.f32 %v2159, %v2168
        %v2183 = vadd.f32 %v2160, %v2168
        %v2184 = vadd.f32 %v2161, %v2168
        %v2185 = vadd.f32 %v2162, %v2168
        %v2186 = vmax.f32 %v2170, 0.0
        %v2187 = vmax.f32 %v2171, 0.0
        %v2188 = vmax.f32 %v2172, 0.0
        %v2189 = vmax.f32 %v2173, 0.0
        %v2190 = vmax.f32 %v2174, 0.0
        %v2191 = vmax.f32 %v2175, 0.0
        %v2192 = vmax.f32 %v2176, 0.0
        %v2193 = vmax.f32 %v2177, 0.0
        %v2194 = vmax.f32 %v2178, 0.0
        %v2195 = vmax.f32 %v2179, 0.0
        %v2196 = vmax.f32 %v2180, 0.0
        %v2197 = vmax.f32 %v2181, 0.0
        %v2198 = vmax.f32 %v2182, 0.0
        %v2199 = vmax.f32 %v2183, 0.0
        %v2200 = vmax.f32 %v2184, 0.0
        %v2201 = vmax.f32 %v2185, 0.0
        %v2202 = vpack.c.bf16 %v2187, %v2186
        %v2203 = vpack.c.bf16 %v2189, %v2188
        %v2204 = vpack.c.bf16 %v2191, %v2190
        %v2205 = vpack.c.bf16 %v2193, %v2192
        %v2206 = vpack.c.bf16 %v2195, %v2194
        %v2207 = vpack.c.bf16 %v2197, %v2196
        %v2208 = vpack.c.bf16 %v2199, %v2198
        %v2209 = vpack.c.bf16 %v2201, %v2200
        %v2210 = vld [vmem:[#allocation10] sm:$0xff]
        %v2211 = vld [vmem:[#allocation10 + $0x8] sm:$0xf]
        %v2212 = vld [vmem:[#allocation10 + $0xc] sm:$0xff]
        %v2213 = vld [vmem:[#allocation10 + $0x14] sm:$0xf]
        %v2214 = vld [vmem:[#allocation10 + $0x18] sm:$0xff]
        %v2215 = vld [vmem:[#allocation10 + $0x20] sm:$0xf]
        %v2216 = vld [vmem:[#allocation10 + $0x24] sm:$0x33]
        %v2217 = vld [vmem:[#allocation10 + $0x2c] sm:$0x3]
        %v2226 = vunpack.c.l.b16 %v2210
        %v2227 = vunpack.c.h.b16 %v2210
        %v2228 = vunpack.c.l.b16 %v2211
        %v2229 = vunpack.c.l.b16 %v2212
        %v2230 = vunpack.c.h.b16 %v2212
        %v2231 = vunpack.c.l.b16 %v2213
        %v2232 = vunpack.c.l.b16 %v2214
        %v2233 = vunpack.c.h.b16 %v2214
        %v2234 = vunpack.c.l.b16 %v2215
        %v2235 = vunpack.c.l.b16 %v2216
        %v2236 = vunpack.c.h.b16 %v2216
        %v2237 = vunpack.c.l.b16 %v2217
        %v2238 = vpack.c.b16 %v2229, %v2226
        %v2239 = vpack.c.b16 %v2230, %v2227
        %v2240 = vpack.c.b16 %v2231, %v2228
        %v2241 = vpack.c.b16 %v2235, %v2232
        %v2242 = vpack.c.b16 %v2236, %v2233
        %v2243 = vpack.c.b16 %v2237, %v2234
        %vm2247 = vcmask 228352
        %v2249 = vsel %vm2247, %v2202, 0
        %v2252 = vsel %vm2247, %v2203, 0
        %v2255 = vsel %vm2247, %v2204, 0
        %v2258 = vsel %vm2247, %v2205, 0
        %v2261 = vsel %vm2247, %v2206, 0
        %v2264 = vsel %vm2247, %v2207, 0
        %v2267 = vsel %vm2247, %v2208, 0
        %v2270 = vsel %vm2247, %v2209, 0
        %vm2272 = vcmask 1045504
        %v2274 = vsel %vm2272, %v2241, 0
        %v2277 = vsel %vm2272, %v2242, 0
        %v2280 = vsel %vm2272, %v2243, 0
        %2282 = vmatprep.subr.bf16.mxu0 %v2239
        %2283 = vmatpush1.bf16.msra.mxu0 %v2238
        %2284 = vmatprep.subr.bf16.mxu0 %v2277
        %2285 = vmatpush1.bf16.msra.mxu0 %v2274
        %2286 = vmatprep.subr.bf16.mxu0 0
        %2287 = vmatpush1.bf16.msra.mxu0 0
        %2288 = vmatprep.subr.bf16.mxu0 0
        %2289 = vmatpush1.bf16.msra.mxu0 0
        %2290 = vmatprep.subr.bf16.mxu0 0
        %2291 = vmatpush1.bf16.msra.mxu0 0
        %2292 = vmatprep.subr.bf16.mxu0 0
        %2293 = vmatpush1.bf16.msra.mxu0 0
        %2294 = vmatprep.subr.bf16.mxu0 0
        %2295 = vmatpush1.bf16.msra.mxu0 0
        %2296 = vmatprep.subr.bf16.mxu0 0
        %2297 = vmatpush1.bf16.msra.mxu0 0
        %2298 = vmatprep.subr.bf16.mxu0 0
        %2299 = vmatpush1.bf16.msra.mxu0 0
        %2300 = vmatprep.subr.bf16.mxu0 0
        %2301 = vmatpush1.bf16.msra.mxu0 0
        %2302 = vmatprep.subr.bf16.mxu0 0
        %2303 = vmatpush1.bf16.msra.mxu0 0
        %2304 = vmatprep.subr.bf16.mxu0 0
        %2305 = vmatpush1.bf16.msra.mxu0 0
        %2306 = vmatprep.subr.bf16.mxu0 0
        %2307 = vmatpush1.bf16.msra.mxu0 0
        %2308 = vmatprep.subr.bf16.mxu0 0
        %2309 = vmatpush1.bf16.msra.mxu0 0
        %2310 = vmatprep.subr.bf16.mxu0 0
        %2311 = vmatpush1.bf16.msra.mxu0 0
        %2312 = vmatprep.subr.bf16.mxu0 0
        %2313 = vmatpush1.bf16.msra.mxu0 0
        %2314 = vmatprep.mubr.bf16.mxu0 0
        %2315 = vmatmul.mubr.bf16.gmra.mrb[0].mxu0 %v2249
        %v2316 = vpop.f32.mrb[0].mxu0
        %v2317 = vadd.f32 0.0, %v2316
        %v2318 = vpop.f32.mrb[0].mxu0
        %v2319 = vadd.f32 0.0, %v2318
        %v2320 = vpop.f32.mrb[0].mxu0
        %v2321 = vpop.f32.mrb[0].mxu0
        %2322 = vmatprep.mubr.bf16.mxu0 0
        %2323 = vmatmul.mubr.bf16.gmra.mrb[0].mxu0 %v2252
        %v2324 = vpop.f32.mrb[0].mxu0
        %v2325 = vadd.f32 0.0, %v2324
        %v2326 = vpop.f32.mrb[0].mxu0
        %v2327 = vadd.f32 0.0, %v2326
        %v2328 = vpop.f32.mrb[0].mxu0
        %v2329 = vpop.f32.mrb[0].mxu0
        %2330 = vmatprep.mubr.bf16.mxu0 0
        %2331 = vmatmul.mubr.bf16.gmra.mrb[0].mxu0 %v2255
        %v2332 = vpop.f32.mrb[0].mxu0
        %v2333 = vadd.f32 0.0, %v2332
        %v2334 = vpop.f32.mrb[0].mxu0
        %v2335 = vadd.f32 0.0, %v2334
        %v2336 = vpop.f32.mrb[0].mxu0
        %v2337 = vpop.f32.mrb[0].mxu0
        %2338 = vmatprep.mubr.bf16.mxu0 0
        %2339 = vmatmul.mubr.bf16.gmra.mrb[0].mxu0 %v2258
        %v2340 = vpop.f32.mrb[0].mxu0
        %v2341 = vadd.f32 0.0, %v2340
        %v2342 = vpop.f32.mrb[0].mxu0
        %v2343 = vadd.f32 0.0, %v2342
        %v2344 = vpop.f32.mrb[0].mxu0
        %v2345 = vpop.f32.mrb[0].mxu0
        %2346 = vmatprep.mubr.bf16.mxu0 0
        %2347 = vmatmul.mubr.bf16.gmra.mrb[0].mxu0 %v2261
        %v2348 = vpop.f32.mrb[0].mxu0
        %v2349 = vadd.f32 0.0, %v2348
        %v2350 = vpop.f32.mrb[0].mxu0
        %v2351 = vadd.f32 0.0, %v2350
        %v2352 = vpop.f32.mrb[0].mxu0
        %v2353 = vpop.f32.mrb[0].mxu0
        %2354 = vmatprep.mubr.bf16.mxu0 0
        %2355 = vmatmul.mubr.bf16.gmra.mrb[0].mxu0 %v2264
        %v2356 = vpop.f32.mrb[0].mxu0
        %v2357 = vadd.f32 0.0, %v2356
        %v2358 = vpop.f32.mrb[0].mxu0
        %v2359 = vadd.f32 0.0, %v2358
        %v2360 = vpop.f32.mrb[0].mxu0
        %v2361 = vpop.f32.mrb[0].mxu0
        %2362 = vmatprep.mubr.bf16.mxu0 0
        %2363 = vmatmul.mubr.bf16.gmra.mrb[0].mxu0 %v2267
        %v2364 = vpop.f32.mrb[0].mxu0
        %v2365 = vadd.f32 0.0, %v2364
        %v2366 = vpop.f32.mrb[0].mxu0
        %v2367 = vadd.f32 0.0, %v2366
        %v2368 = vpop.f32.mrb[0].mxu0
        %v2369 = vpop.f32.mrb[0].mxu0
        %2370 = vmatprep.mubr.bf16.mxu0 0
        %2371 = vmatmul.mubr.bf16.gmra.mrb[0].mxu0 %v2270
        %v2372 = vpop.f32.mrb[0].mxu0
        %v2373 = vadd.f32 0.0, %v2372
        %v2374 = vpop.f32.mrb[0].mxu0
        %v2375 = vadd.f32 0.0, %v2374
        %v2376 = vpop.f32.mrb[0].mxu0
        %v2377 = vpop.f32.mrb[0].mxu0
        %2378 = vdwg.mxu0
        %2379 = vmatprep.subr.bf16.mxu0 0
        %2380 = vmatpush1.bf16.msra.mxu0 %v2240
        %2381 = vmatprep.subr.bf16.mxu0 0
        %2382 = vmatpush1.bf16.msra.mxu0 %v2280
        %2383 = vmatprep.subr.bf16.mxu0 0
        %2384 = vmatpush1.bf16.msra.mxu0 0
        %2385 = vmatprep.subr.bf16.mxu0 0
        %2386 = vmatpush1.bf16.msra.mxu0 0
        %2387 = vmatprep.subr.bf16.mxu0 0
        %2388 = vmatpush1.bf16.msra.mxu0 0
        %2389 = vmatprep.subr.bf16.mxu0 0
        %2390 = vmatpush1.bf16.msra.mxu0 0
        %2391 = vmatprep.subr.bf16.mxu0 0
        %2392 = vmatpush1.bf16.msra.mxu0 0
        %2393 = vmatprep.subr.bf16.mxu0 0
        %2394 = vmatpush1.bf16.msra.mxu0 0
        %2395 = vmatprep.subr.bf16.mxu0 0
        %2396 = vmatpush1.bf16.msra.mxu0 0
        %2397 = vmatprep.subr.bf16.mxu0 0
        %2398 = vmatpush1.bf16.msra.mxu0 0
        %2399 = vmatprep.subr.bf16.mxu0 0
        %2400 = vmatpush1.bf16.msra.mxu0 0
        %2401 = vmatprep.subr.bf16.mxu0 0
        %2402 = vmatpush1.bf16.msra.mxu0 0
        %2403 = vmatprep.subr.bf16.mxu0 0
        %2404 = vmatpush1.bf16.msra.mxu0 0
        %2405 = vmatprep.subr.bf16.mxu0 0
        %2406 = vmatpush1.bf16.msra.mxu0 0
        %2407 = vmatprep.subr.bf16.mxu0 0
        %2408 = vmatpush1.bf16.msra.mxu0 0
        %2409 = vmatprep.subr.bf16.mxu0 0
        %2410 = vmatpush1.bf16.msra.mxu0 0
        %2411 = vmatprep.mubr.bf16.mxu0 0
        %2412 = vmatmul.mubr.bf16.gmra.mrb[0].mxu0 %v2249
        %v2413 = vpop.f32.mrb[0].mxu0
        %v2414 = vadd.f32 0.0, %v2413
        %v2415 = vpop.f32.mrb[0].mxu0
        %v2416 = vpop.f32.mrb[0].mxu0
        %v2417 = vpop.f32.mrb[0].mxu0
        %2418 = vmatprep.mubr.bf16.mxu0 0
        %2419 = vmatmul.mubr.bf16.gmra.mrb[0].mxu0 %v2252
        %v2420 = vpop.f32.mrb[0].mxu0
        %v2421 = vadd.f32 0.0, %v2420
        %v2422 = vpop.f32.mrb[0].mxu0
        %v2423 = vpop.f32.mrb[0].mxu0
        %v2424 = vpop.f32.mrb[0].mxu0
        %2425 = vmatprep.mubr.bf16.mxu0 0
        %2426 = vmatmul.mubr.bf16.gmra.mrb[0].mxu0 %v2255
        %v2427 = vpop.f32.mrb[0].mxu0
        %v2428 = vadd.f32 0.0, %v2427
        %v2429 = vpop.f32.mrb[0].mxu0
        %v2430 = vpop.f32.mrb[0].mxu0
        %v2431 = vpop.f32.mrb[0].mxu0
        %2432 = vmatprep.mubr.bf16.mxu0 0
        %2433 = vmatmul.mubr.bf16.gmra.mrb[0].mxu0 %v2258
        %v2434 = vpop.f32.mrb[0].mxu0
        %v2435 = vadd.f32 0.0, %v2434
        %v2436 = vpop.f32.mrb[0].mxu0
        %v2437 = vpop.f32.mrb[0].mxu0
        %v2438 = vpop.f32.mrb[0].mxu0
        %2439 = vmatprep.mubr.bf16.mxu0 0
        %2440 = vmatmul.mubr.bf16.gmra.mrb[0].mxu0 %v2261
        %v2441 = vpop.f32.mrb[0].mxu0
        %v2442 = vadd.f32 0.0, %v2441
        %v2443 = vpop.f32.mrb[0].mxu0
        %v2444 = vpop.f32.mrb[0].mxu0
        %v2445 = vpop.f32.mrb[0].mxu0
        %2446 = vmatprep.mubr.bf16.mxu0 0
        %2447 = vmatmul.mubr.bf16.gmra.mrb[0].mxu0 %v2264
        %v2448 = vpop.f32.mrb[0].mxu0
        %v2449 = vadd.f32 0.0, %v2448
        %v2450 = vpop.f32.mrb[0].mxu0
        %v2451 = vpop.f32.mrb[0].mxu0
        %v2452 = vpop.f32.mrb[0].mxu0
        %2453 = vmatprep.mubr.bf16.mxu0 0
        %2454 = vmatmul.mubr.bf16.gmra.mrb[0].mxu0 %v2267
        %v2455 = vpop.f32.mrb[0].mxu0
        %v2456 = vadd.f32 0.0, %v2455
        %v2457 = vpop.f32.mrb[0].mxu0
        %v2458 = vpop.f32.mrb[0].mxu0
        %v2459 = vpop.f32.mrb[0].mxu0
        %2460 = vmatprep.mubr.bf16.mxu0 0
        %2461 = vmatmul.mubr.bf16.gmra.mrb[0].mxu0 %v2270
        %v2462 = vpop.f32.mrb[0].mxu0
        %v2463 = vadd.f32 0.0, %v2462
        %v2464 = vpop.f32.mrb[0].mxu0
        %v2465 = vpop.f32.mrb[0].mxu0
        %v2466 = vpop.f32.mrb[0].mxu0
        %2467 = vdwg.mxu0
        %v2476 = vrot.slane %v2319, 1
        %v2477 = vrot.slane %v2327, 1
        %v2478 = vrot.slane %v2335, 1
        %v2479 = vrot.slane %v2343, 1
        %v2480 = vrot.slane %v2351, 1
        %v2481 = vrot.slane %v2359, 1
        %v2482 = vrot.slane %v2367, 1
        %v2483 = vrot.slane %v2375, 1
        %v2492 = vadd.f32 %v2317, %v2476
        %v2493 = vadd.f32 %v2325, %v2477
        %v2494 = vadd.f32 %v2333, %v2478
        %v2495 = vadd.f32 %v2341, %v2479
        %v2496 = vadd.f32 %v2349, %v2480
        %v2497 = vadd.f32 %v2357, %v2481
        %v2498 = vadd.f32 %v2365, %v2482
        %v2499 = vadd.f32 %v2373, %v2483
        %v2508 = vrot.slane %v2414, 2
        %v2509 = vrot.slane %v2421, 2
        %v2510 = vrot.slane %v2428, 2
        %v2511 = vrot.slane %v2435, 2
        %v2512 = vrot.slane %v2442, 2
        %v2513 = vrot.slane %v2449, 2
        %v2514 = vrot.slane %v2456, 2
        %v2515 = vrot.slane %v2463, 2
        %v2524 = vadd.f32 %v2492, %v2508
        %v2525 = vadd.f32 %v2493, %v2509
        %v2526 = vadd.f32 %v2494, %v2510
        %v2527 = vadd.f32 %v2495, %v2511
        %v2528 = vadd.f32 %v2496, %v2512
        %v2529 = vadd.f32 %v2497, %v2513
        %v2530 = vadd.f32 %v2498, %v2514
        %v2531 = vadd.f32 %v2499, %v2515
        %v2532 = vld [vmem:[#allocation11] sm:$0x1]
        %v2534 = vlaneseq
        %v2535 = vshrl.u32 %v2534, 7
        %v2536 = vsub.s32 0, %v2535
        %v2537 = vrot.slane %v2532, %v2536
        %v2539 = vadd.f32 %v2524, %v2537
        %v2540 = vadd.f32 %v2525, %v2537
        %v2541 = vadd.f32 %v2526, %v2537
        %v2542 = vadd.f32 %v2527, %v2537
        %v2543 = vadd.f32 %v2528, %v2537
        %v2544 = vadd.f32 %v2529, %v2537
        %v2545 = vadd.f32 %v2530, %v2537
        %v2546 = vadd.f32 %v2531, %v2537
        %v2547 = vsel %vm2272, %v2539, -inf
        %v2548 = vrot.slane %v2547, 4
        %v2549 = vmax.f32 %v2547, %v2548
        %v2550 = vrot.slane %v2549, 2
        %v2551 = vmax.f32 %v2549, %v2550
        %v2552 = vrot.slane %v2551, 1
        %v2553 = vmax.f32 %v2551, %v2552
        %v2554 = vsel %vm2272, %v2540, -inf
        %v2555 = vrot.slane %v2554, 4
        %v2556 = vmax.f32 %v2554, %v2555
        %v2557 = vrot.slane %v2556, 2
        %v2558 = vmax.f32 %v2556, %v2557
        %v2559 = vrot.slane %v2558, 1
        %v2560 = vmax.f32 %v2558, %v2559
        %v2561 = vsel %vm2272, %v2541, -inf
        %v2562 = vrot.slane %v2561, 4
        %v2563 = vmax.f32 %v2561, %v2562
        %v2564 = vrot.slane %v2563, 2
        %v2565 = vmax.f32 %v2563, %v2564
        %v2566 = vrot.slane %v2565, 1
        %v2567 = vmax.f32 %v2565, %v2566
        %v2568 = vsel %vm2272, %v2542, -inf
        %v2569 = vrot.slane %v2568, 4
        %v2570 = vmax.f32 %v2568, %v2569
        %v2571 = vrot.slane %v2570, 2
        %v2572 = vmax.f32 %v2570, %v2571
        %v2573 = vrot.slane %v2572, 1
        %v2574 = vmax.f32 %v2572, %v2573
        %v2575 = vsel %vm2272, %v2543, -inf
        %v2576 = vrot.slane %v2575, 4
        %v2577 = vmax.f32 %v2575, %v2576
        %v2578 = vrot.slane %v2577, 2
        %v2579 = vmax.f32 %v2577, %v2578
        %v2580 = vrot.slane %v2579, 1
        %v2581 = vmax.f32 %v2579, %v2580
        %v2582 = vsel %vm2272, %v2544, -inf
        %v2583 = vrot.slane %v2582, 4
        %v2584 = vmax.f32 %v2582, %v2583
        %v2585 = vrot.slane %v2584, 2
        %v2586 = vmax.f32 %v2584, %v2585
        %v2587 = vrot.slane %v2586, 1
        %v2588 = vmax.f32 %v2586, %v2587
        %v2589 = vsel %vm2272, %v2545, -inf
        %v2590 = vrot.slane %v2589, 4
        %v2591 = vmax.f32 %v2589, %v2590
        %v2592 = vrot.slane %v2591, 2
        %v2593 = vmax.f32 %v2591, %v2592
        %v2594 = vrot.slane %v2593, 1
        %v2595 = vmax.f32 %v2593, %v2594
        %v2596 = vsel %vm2272, %v2546, -inf
        %v2597 = vrot.slane %v2596, 4
        %v2598 = vmax.f32 %v2596, %v2597
        %v2599 = vrot.slane %v2598, 2
        %v2600 = vmax.f32 %v2598, %v2599
        %v2601 = vrot.slane %v2600, 1
        %v2602 = vmax.f32 %v2600, %v2601
        %v2603 = vmax.f32 %v2553, 0.0
        %v2604 = vmax.f32 %v2560, 0.0
        %v2605 = vmax.f32 %v2567, 0.0
        %v2606 = vmax.f32 %v2574, 0.0
        %v2607 = vmax.f32 %v2581, 0.0
        %v2608 = vmax.f32 %v2588, 0.0
        %v2609 = vmax.f32 %v2595, 0.0
        %v2610 = vmax.f32 %v2602, 0.0
        %v2611 = vpack.c.bf16 %v2603, %v2603
        %v2612 = vpack.c.bf16 %v2604, %v2604
        %v2613 = vpack.c.bf16 %v2605, %v2605
        %v2614 = vpack.c.bf16 %v2606, %v2606
        %v2615 = vpack.c.bf16 %v2607, %v2607
        %v2616 = vpack.c.bf16 %v2608, %v2608
        %v2617 = vpack.c.bf16 %v2609, %v2609
        %v2618 = vpack.c.bf16 %v2610, %v2610
        %v2619 = vld [vmem:[#allocation13] sm:$0xf]
        %v2620 = vld [vmem:[#allocation13 + $0x4] sm:$0xf]
        %v2621 = vld [vmem:[#allocation13 + $0x8] sm:$0xf]
        %v2622 = vld [vmem:[#allocation13 + $0xc] sm:$0xf]
        %v2623 = vld [vmem:[#allocation13 + $0x10] sm:$0xf]
        %v2624 = vld [vmem:[#allocation13 + $0x14] sm:$0xf]
        %v2625 = vld [vmem:[#allocation13 + $0x18] sm:$0xf]
        %v2626 = vld [vmem:[#allocation13 + $0x1c] sm:$0xf]
        %v2627 = vld [vmem:[#allocation13 + $0x20] sm:$0xf]
        %v2628 = vld [vmem:[#allocation13 + $0x24] sm:$0xf]
        %v2629 = vld [vmem:[#allocation13 + $0x28] sm:$0xf]
        %v2630 = vld [vmem:[#allocation13 + $0x2c] sm:$0xf]
        %v2631 = vld [vmem:[#allocation13 + $0x30] sm:$0xf]
        %v2632 = vld [vmem:[#allocation13 + $0x34] sm:$0xf]
        %v2633 = vld [vmem:[#allocation13 + $0x38] sm:$0xf]
        %v2634 = vld [vmem:[#allocation13 + $0x3c] sm:$0xf]
        %v2635 = vld [vmem:[#allocation14] sm:$0x1]
        %v2637 = vlaneseq
        %v2638 = vshrl.u32 %v2637, 7
        %v2639 = vsub.s32 0, %v2638
        %v2640 = vrot.slane %v2635, %v2639
        %v2650 = vunpack.c.l.b16 %v2611
        %v2651 = vunpack.c.l.b16 %v2612
        %v2652 = vunpack.c.l.b16 %v2613
        %v2653 = vunpack.c.l.b16 %v2614
        %v2654 = vunpack.c.l.b16 %v2615
        %v2655 = vunpack.c.l.b16 %v2616
        %v2656 = vunpack.c.l.b16 %v2617
        %v2657 = vunpack.c.l.b16 %v2618
        %vm2658 = vcmask 1041409
        %v2659 = vsel %vm2658, %v2651, %v2650
        %vm2660 = vcmask 1042434
        %v2661 = vsel %vm2660, %v2652, %v2659
        %vm2662 = vcmask 1043459
        %v2663 = vsel %vm2662, %v2653, %v2661
        %vm2664 = vcmask 1044484
        %v2665 = vsel %vm2664, %v2654, %v2663
        %vm2666 = vcmask 1045509
        %v2667 = vsel %vm2666, %v2655, %v2665
        %vm2668 = vcmask 1046534
        %v2669 = vsel %vm2668, %v2656, %v2667
        %vm2670 = vcmask 1047559
        %v2671 = vsel %vm2670, %v2657, %v2669
        %v2672 = vpack.c.b16 %v2671, %v2671
        %v2690 = vunpack.c.l.b16 %v2619
        %v2691 = vunpack.c.l.b16 %v2620
        %v2692 = vunpack.c.l.b16 %v2621
        %v2693 = vunpack.c.l.b16 %v2622
        %v2694 = vunpack.c.l.b16 %v2623
        %v2695 = vunpack.c.l.b16 %v2624
        %v2696 = vunpack.c.l.b16 %v2625
        %v2697 = vunpack.c.l.b16 %v2626
        %v2698 = vunpack.c.l.b16 %v2627
        %v2699 = vunpack.c.l.b16 %v2628
        %v2700 = vunpack.c.l.b16 %v2629
        %v2701 = vunpack.c.l.b16 %v2630
        %v2702 = vunpack.c.l.b16 %v2631
        %v2703 = vunpack.c.l.b16 %v2632
        %v2704 = vunpack.c.l.b16 %v2633
        %v2705 = vunpack.c.l.b16 %v2634
        %v2706 = vpack.c.b16 %v2691, %v2690
        %v2707 = vpack.c.b16 %v2693, %v2692
        %v2708 = vpack.c.b16 %v2695, %v2694
        %v2709 = vpack.c.b16 %v2697, %v2696
        %v2710 = vpack.c.b16 %v2699, %v2698
        %v2711 = vpack.c.b16 %v2701, %v2700
        %v2712 = vpack.c.b16 %v2703, %v2702
        %v2713 = vpack.c.b16 %v2705, %v2704
        %2722 = vmatprep.subr.bf16.mxu0 0
        %2723 = vmatpush1.bf16.msra.mxu0 %v2706
        %2724 = vmatprep.subr.bf16.mxu0 0
        %2725 = vmatpush1.bf16.msra.mxu0 %v2707
        %2726 = vmatprep.subr.bf16.mxu0 0
        %2727 = vmatpush1.bf16.msra.mxu0 %v2708
        %2728 = vmatprep.subr.bf16.mxu0 0
        %2729 = vmatpush1.bf16.msra.mxu0 %v2709
        %2730 = vmatprep.subr.bf16.mxu0 0
        %2731 = vmatpush1.bf16.msra.mxu0 %v2710
        %2732 = vmatprep.subr.bf16.mxu0 0
        %2733 = vmatpush1.bf16.msra.mxu0 %v2711
        %2734 = vmatprep.subr.bf16.mxu0 0
        %2735 = vmatpush1.bf16.msra.mxu0 %v2712
        %2736 = vmatprep.subr.bf16.mxu0 0
        %2737 = vmatpush1.bf16.msra.mxu0 %v2713
        %2738 = vmatprep.subr.bf16.mxu0 0
        %2739 = vmatpush1.bf16.msra.mxu0 0
        %2740 = vmatprep.subr.bf16.mxu0 0
        %2741 = vmatpush1.bf16.msra.mxu0 0
        %2742 = vmatprep.subr.bf16.mxu0 0
        %2743 = vmatpush1.bf16.msra.mxu0 0
        %2744 = vmatprep.subr.bf16.mxu0 0
        %2745 = vmatpush1.bf16.msra.mxu0 0
        %2746 = vmatprep.subr.bf16.mxu0 0
        %2747 = vmatpush1.bf16.msra.mxu0 0
        %2748 = vmatprep.subr.bf16.mxu0 0
        %2749 = vmatpush1.bf16.msra.mxu0 0
        %2750 = vmatprep.subr.bf16.mxu0 0
        %2751 = vmatpush1.bf16.msra.mxu0 0
        %2752 = vmatprep.subr.bf16.mxu0 0
        %2753 = vmatpush1.bf16.msra.mxu0 0
        %2754 = vmatprep.mubr.bf16.mxu0 0
        %2755 = vmatmul.mubr.bf16.gmra.mrb[0].mxu0 %v2672
        %v2756 = vpop.f32.mrb[0].mxu0
        %v2757 = vadd.f32 %v2640, %v2756
        %v2758 = vpop.f32.mrb[0].mxu0
        %v2759 = vpop.f32.mrb[0].mxu0
        %v2760 = vpop.f32.mrb[0].mxu0
        %2761 = vdwg.mxu0
        %v2762 = vmax.f32 %v2757, 0.0
        %v2763 = vpack.c.bf16 %v2762, %v2762
        %v2764 = vld [vmem:[#allocation16] sm:$0xf]
        %v2765 = vld [vmem:[#allocation16 + $0x4] sm:$0xf]
        %v2766 = vld [vmem:[#allocation16 + $0x8] sm:$0xf]
        %v2767 = vld [vmem:[#allocation16 + $0xc] sm:$0xf]
        %v2768 = vld [vmem:[#allocation16 + $0x10] sm:$0xf]
        %v2769 = vld [vmem:[#allocation16 + $0x14] sm:$0xf]
        %v2770 = vld [vmem:[#allocation16 + $0x18] sm:$0x1]
        %v2771 = vld [vmem:[#allocation17] sm:$0x1]
        %v2773 = vlaneseq
        %v2774 = vshrl.u32 %v2773, 7
        %v2775 = vsub.s32 0, %v2774
        %v2776 = vrot.slane %v2771, %v2775
        %v2785 = vunpack.c.l.b16 %v2764
        %v2786 = vunpack.c.l.b16 %v2765
        %v2787 = vunpack.c.l.b16 %v2766
        %v2788 = vunpack.c.l.b16 %v2767
        %v2789 = vunpack.c.l.b16 %v2768
        %v2790 = vunpack.c.l.b16 %v2769
        %v2791 = vunpack.c.l.b16 %v2770
        %v2792 = vpack.c.b16 %v2786, %v2785
        %v2793 = vpack.c.b16 %v2788, %v2787
        %v2794 = vpack.c.b16 %v2790, %v2789
        %v2795 = vpack.c.b16 %v2791, %v2791
        %v2800 = vsel %vm703, %v2763, 0
        %v2803 = vsel %vm752, %v2795, 0
        %2805 = vmatprep.subr.bf16.mxu0 0
        %2806 = vmatpush1.bf16.msra.mxu0 %v2792
        %2807 = vmatprep.subr.bf16.mxu0 0
        %2808 = vmatpush1.bf16.msra.mxu0 %v2793
        %2809 = vmatprep.subr.bf16.mxu0 0
        %2810 = vmatpush1.bf16.msra.mxu0 %v2794
        %2811 = vmatprep.subr.bf16.mxu0 0
        %2812 = vmatpush1.bf16.msra.mxu0 %v2803
        %2813 = vmatprep.subr.bf16.mxu0 0
        %2814 = vmatpush1.bf16.msra.mxu0 0
        %2815 = vmatprep.subr.bf16.mxu0 0
        %2816 = vmatpush1.bf16.msra.mxu0 0
        %2817 = vmatprep.subr.bf16.mxu0 0
        %2818 = vmatpush1.bf16.msra.mxu0 0
        %2819 = vmatprep.subr.bf16.mxu0 0
        %2820 = vmatpush1.bf16.msra.mxu0 0
        %2821 = vmatprep.subr.bf16.mxu0 0
        %2822 = vmatpush1.bf16.msra.mxu0 0
        %2823 = vmatprep.subr.bf16.mxu0 0
        %2824 = vmatpush1.bf16.msra.mxu0 0
        %2825 = vmatprep.subr.bf16.mxu0 0
        %2826 = vmatpush1.bf16.msra.mxu0 0
        %2827 = vmatprep.subr.bf16.mxu0 0
        %2828 = vmatpush1.bf16.msra.mxu0 0
        %2829 = vmatprep.subr.bf16.mxu0 0
        %2830 = vmatpush1.bf16.msra.mxu0 0
        %2831 = vmatprep.subr.bf16.mxu0 0
        %2832 = vmatpush1.bf16.msra.mxu0 0
        %2833 = vmatprep.subr.bf16.mxu0 0
        %2834 = vmatpush1.bf16.msra.mxu0 0
        %2835 = vmatprep.subr.bf16.mxu0 0
        %2836 = vmatpush1.bf16.msra.mxu0 0
        %2837 = vmatprep.mubr.bf16.mxu0 0
        %2838 = vmatmul.mubr.bf16.gmra.mrb[0].mxu0 %v2800
        %v2839 = vpop.f32.mrb[0].mxu0
        %v2840 = vadd.f32 %v2776, %v2839
        %v2841 = vpop.f32.mrb[0].mxu0
        %v2842 = vpop.f32.mrb[0].mxu0
        %v2843 = vpop.f32.mrb[0].mxu0
        %2844 = vdwg.mxu0
        %v2845 = vlaneseq
        %v2846 = vand.u32 %v2845, 127
        %vm2847 = vcmp.lt.s32.totalorder %v2846, 4
        %v2848 = vsel %vm2847, %v2840, -inf
        %2849 = vmax.xlane.f32.xlu0 %v2848
        %v2850 = vpop.xlane.xlu0 %2849
        %v2851 = vsub.f32 %v2848, %v2850
        %v2852 = vmul.f32 %v2851, 1.442695
        %v2853 = vpow.pop %v2852
        %2854 = vadd.xlane.f32.xlu0 %v2853
        %v2855 = vpop.xlane.xlu0 %2854
        %v2856 = vrcp.pop %v2855
        %v2857 = vmul.f32 %v2853, %v2856
        %2858 = vst [vmem:[%s527] sm:$0xff] %v2857
        %s2859 = sand.u32 %s262, 1
        %s2860 = scalar_lea.sflag [#allocation4], %s2859
        %s2861 = sand.u32 %s262, 1
        %s2862 = smul.addr %s2861, 8
        %s2863 = scalar_lea.vmem [#allocation19], %s2862
        // Predicated region
        $region101: #{tpu_custom_call.1} parent=59 // pred_check
          %p2864 = pneg %p272
        $region102: #{tpu_custom_call.1} parent=59 // pred_check_branch
          %2866 = sbr.rel (%p2864) target = $region104
        $region103: #{tpu_custom_call.1} parent=59 // pred_region
          %s2868 = ssub.s32 128, 128
          %2869 = vsyncadd %s2860, %s2868
          %s2870 = smul.addr %s34, 128
          %s2871 = scalar_lea.hbm %s10, %s2870
          %s2873 = sshll.u32 %s2863, 4
          %s2874 = int_to_ptr.vmem [resolvable:$true] %s2873
          %2876 = dma.vmem_to_hbm [thread:$0]  %s2874, 128, %s2871, %s2860
        $region104: #{tpu_custom_call.1} parent=59 // pred_fallthru
          _
      $region60: #{tpu_custom_call.1} parent=5 // pred_fallthru
        _
      %p2877 = scmp.le.s32.totalorder 2, %s29
      // Predicated region
      $region105: #{tpu_custom_call.1} parent=5 // pred_check
        %p2878 = pneg %p2877
      $region106: #{tpu_custom_call.1} parent=5 // pred_check_branch
        %2880 = sbr.rel (%p2878) target = $region108
      $region107: #{tpu_custom_call.1} parent=5 // pred_region
        %s2881 = ssub.s32 %s29, 2
        // Predicated region
        $region109: #{tpu_custom_call.1} parent=107 // pred_check
          %p2882 = pneg %p278
        $region110: #{tpu_custom_call.1} parent=107 // pred_check_branch
          %2884 = sbr.rel (%p2882) target = $region112
        $region111: #{tpu_custom_call.1} parent=107 // pred_region
          %s2885 = sand.u32 %s263, 1
          %s2886 = scalar_lea.sflag [#allocation4], %s2885
          %s2887 = sand.u32 %s263, 1
          %s2888 = smul.addr %s2887, 8
          %s2889 = scalar_lea.vmem [#allocation19], %s2888
          %2890 = dma.done %s2886, 128
        $region112: #{tpu_custom_call.1} parent=107 // pred_fallthru
          _
      $region108: #{tpu_custom_call.1} parent=5 // pred_fallthru
        _
    $region6: #{tpu_custom_call.1} parent=1 // loop_footer
      %s33 = sadd.s32 1, %s29
    $region7: #{tpu_custom_call.1} parent=1 // loop_footer_branch
      %28 = sbr.rel target = $region3
    $region8: #{tpu_custom_call.1} parent=1 // loop_exit
      _
    %2891 = vsyncpa [#allocation3], 1
    %s2892 = scalar_lea.sflag [#allocation3], 1
    %2893 = vsyncpa %s2892, 1
    %2894 = vsyncpa [#allocation6], 1
    %s2895 = scalar_lea.sflag [#allocation6], 1
    %2896 = vsyncpa %s2895, 1
    %2897 = vsyncpa [#allocation9], 1
    %2898 = vsyncpa [#allocation12], 1
    %2899 = vsyncpa [#allocation15], 1
    %2900 = vsyncpa [#allocation18], 1
    %2901 = vsyncpa [#allocation4], 1
    %s2902 = scalar_lea.sflag [#allocation4], 1
    %2903 = vsyncpa %s2902, 1

</llo_original>
